<compile_context>
chip_gen: v7x
topology: tpu7x:2x2x1
jax: 0.10.0
libtpu: 0.0.40
codegen_flags: <defaults>
</compile_context>

<pallas_src>
import functools
import itertools
import math

import jax
import jax.numpy as jnp
from jax import lax
from jax.experimental import pallas as pl
from jax.experimental.pallas import tpu as pltpu

VMEM_LIMIT = 48 * 1024 * 1024  # covers the largest resident activation block


def _round_up(a, b):
    return ((a + b - 1) // b) * b


def _choose_tm(rows):
    return 512 if rows >= 512 else _round_up(rows, 8)


# ----------------------------------------------------------------------------
# Pallas kernel 1: fused stride-1 sparse conv (im2col fused as row shifts)
# ----------------------------------------------------------------------------
@functools.lru_cache(maxsize=None)
def _build_shiftconv(TM, Rg, Cin, Cout, KN, Rout, has_res):
    def kernel(flags_ref, offs_ref, x_ref, w_ref, shift_ref, mask_ref, *rest):
        if has_res:
            res_ref, o_ref, acc_ref = rest
        else:
            o_ref, acc_ref = rest
            res_ref = None
        i = pl.program_id(0)
        j = pl.program_id(1)

        @pl.when(j == 0)
        def _():
            acc_ref[...] = jnp.zeros_like(acc_ref)

        # Skip the MXU work for row tiles with no active output voxel.
        @pl.when(flags_ref[i] != 0)
        def _():
            start = i * TM + offs_ref[j]           # guarded, always in-bounds
            xt = x_ref[pl.ds(start, TM), :].astype(jnp.bfloat16)
            acc_ref[...] += jnp.dot(xt, w_ref[0],
                                    preferred_element_type=jnp.float32)

        @pl.when(j == KN - 1)
        def _():
            y = acc_ref[...] + shift_ref[...]
            if res_ref is not None:
                y = y + res_ref[...].astype(jnp.float32)
            y = jnp.maximum(y, 0.0)
            o_ref[...] = (y * mask_ref[...]).astype(o_ref.dtype)

    in_specs = [
        pl.BlockSpec((Rg, Cin), lambda i, j, *_: (0, 0)),          # resident activations
        pl.BlockSpec((1, Cin, Cout), lambda i, j, *_: (j, 0, 0)),  # per-offset bf16 weights
        pl.BlockSpec((1, Cout), lambda i, j, *_: (0, 0)),          # folded BN/bias shift
        pl.BlockSpec((TM, 1), lambda i, j, *_: (i, 0)),            # output active mask
    ]
    if has_res:
        in_specs.append(pl.BlockSpec((TM, Cout), lambda i, j, *_: (i, 0)))

    grid_spec = pltpu.PrefetchScalarGridSpec(
        num_scalar_prefetch=2,                     # (tile flags, row offsets)
        grid=(Rout // TM, KN),
        in_specs=in_specs,
        out_specs=pl.BlockSpec((TM, Cout), lambda i, j, *_: (i, 0)),
        scratch_shapes=[pltpu.VMEM((TM, Cout), jnp.float32)],
    )
    return pl.pallas_call(
        kernel,
        out_shape=jax.ShapeDtypeStruct((Rout, Cout), jnp.bfloat16),
        grid_spec=grid_spec,
        compiler_params=pltpu.CompilerParams(
            dimension_semantics=("parallel", "arbitrary"),
            vmem_limit_bytes=VMEM_LIMIT),
    )


# ----------------------------------------------------------------------------
# Pallas kernel 2: fused matmul for the (small) stride-2 downsampling convs
# ----------------------------------------------------------------------------
@functools.lru_cache(maxsize=None)
def _build_downconv(TM, Mp, K, N):
    def kernel(x_ref, w_ref, shift_ref, mask_ref, o_ref):
        y = jnp.dot(x_ref[...], w_ref[...], preferred_element_type=jnp.float32)
        y = jnp.maximum(y + shift_ref[...], 0.0)
        o_ref[...] = (y * mask_ref[...]).astype(o_ref.dtype)

    return pl.pallas_call(
        kernel,
        out_shape=jax.ShapeDtypeStruct((Mp, N), jnp.bfloat16),
        grid=(Mp // TM,),
        in_specs=[pl.BlockSpec((TM, K), lambda i: (i, 0)),
                  pl.BlockSpec((K, N), lambda i: (0, 0)),
                  pl.BlockSpec((1, N), lambda i: (0, 0)),
                  pl.BlockSpec((TM, 1), lambda i: (i, 0))],
        out_specs=pl.BlockSpec((TM, N), lambda i: (i, 0)),
        compiler_params=pltpu.CompilerParams(
            dimension_semantics=("parallel",),
            vmem_limit_bytes=VMEM_LIMIT),
    )


# ----------------------------------------------------------------------------
# Pallas kernel 3: bev_out z-reduction (tiled over the BEV rows)
# ----------------------------------------------------------------------------
def _zsum_kernel(x_ref, o_ref):
    o_ref[...] = jnp.sum(x_ref[...], axis=0)


@functools.lru_cache(maxsize=None)
def _build_zsum(D, Mp, C, TMz):
    return pl.pallas_call(
        _zsum_kernel,
        out_shape=jax.ShapeDtypeStruct((Mp, C), jnp.float32),
        grid=(Mp // TMz,),
        in_specs=[pl.BlockSpec((D, TMz, C), lambda i: (0, i, 0))],
        out_specs=pl.BlockSpec((TMz, C), lambda i: (i, 0)),
        compiler_params=pltpu.CompilerParams(
            dimension_semantics=("parallel",),
            vmem_limit_bytes=VMEM_LIMIT),
    )


def zsum_bev(merged):
    B, D, H, W, C = merged.shape
    M = B * H * W
    zin = jnp.transpose(merged, (1, 0, 2, 3, 4)).reshape(D, M, C).astype(jnp.float32)
    TMz = min(256, _round_up(M, 8))
    Mp = _round_up(M, TMz)
    zin = jnp.pad(zin, ((0, 0), (0, Mp - M), (0, 0)))
    out = _build_zsum(D, Mp, C, TMz)(zin)[:M]
    return out.reshape(B, H, W, C)


# ----------------------------------------------------------------------------
# Padded-layout plumbing (wrapper-side, pure JAX)
#   Activations for a resolution are stored flattened over the zero-padded
#   grid (halo = 1) so consecutive stride-1 convs chain with no re-pad/slice.
# ----------------------------------------------------------------------------
def to_layout(x, mask, pad=1):
    nsp = x.ndim - 2
    xp = jnp.pad(x.astype(jnp.bfloat16), [(0, 0)] + [(pad, pad)] * nsp + [(0, 0)])
    mp = jnp.pad(mask.astype(jnp.float32), [(0, 0)] + [(pad, pad)] * nsp)
    bdims = xp.shape[:-1]
    C = xp.shape[-1]
    R = math.prod(bdims)
    TM = _choose_tm(R)
    Rout = _round_up(R, TM)
    xf = jnp.pad(xp.reshape(R, C), ((0, Rout - R), (0, 0)))
    mf = jnp.pad(mp.reshape(R, 1), ((0, Rout - R), (0, 0)))
    return dict(x=xf, mask=mf, bdims=bdims, pad=pad, R=R, TM=TM, Rout=Rout, C=C)


def from_layout(L):
    bdims, pad, C = L['bdims'], L['pad'], L['C']
    x = L['x'][:L['R']].reshape(bdims + (C,))
    m = L['mask'][:L['R'], 0].reshape(bdims)
    sl = (slice(None),) + tuple(slice(pad, d - pad) for d in bdims[1:])
    return x[sl + (slice(None),)], m[sl]


def _mask_rows(mask, pad, Rout):
    nsp = mask.ndim - 1
    mp = jnp.pad(mask.astype(jnp.float32), [(0, 0)] + [(pad, pad)] * nsp)
    R = mp.size
    return jnp.pad(mp.reshape(R, 1), ((0, Rout - R), (0, 0)))


def dilate_mask_same(mask, k):
    nsp = mask.ndim - 1
    out = lax.reduce_window(mask.astype(jnp.float32), 0.0, lax.max,
                            (1,) + (k,) * nsp, (1,) * (nsp + 1), 'SAME')
    return (out > 0).astype(jnp.float32)


def fold_bn(prm):
    scale = prm['gamma'] * jax.lax.rsqrt(prm['var'] + prm['eps'])
    w = (prm['w'] * scale[None, None, :]).astype(jnp.bfloat16)       # (KN, Cin, Cout)
    shift = ((prm['conv_bias'] - prm['mean']) * scale + prm['beta'])
    return w, shift.reshape(1, -1).astype(jnp.float32)


# ----------------------------------------------------------------------------
# Layer wrappers
# ----------------------------------------------------------------------------
def shift_conv(L, prm, residual=None, out_mask_rows=None):
    """Stride-1 conv (k = 2*pad+1) + BN(eval) + ReLU on a padded-layout tensor."""
    bdims, pad = L['bdims'], L['pad']
    sp = bdims[1:]
    k = 2 * pad + 1
    strides, s = [], 1
    for d in sp[::-1]:
        strides.append(s)
        s *= d
    strides = strides[::-1]                                   # e.g. (Hp*Wp, Wp, 1)
    G = pad * sum(strides)                                    # max |row shift|
    offs = [sum((o - pad) * st for o, st in zip(offset, strides)) + G
            for offset in itertools.product(range(k), repeat=len(sp))]
    offs = jnp.asarray(offs, jnp.int32)
    KN = k ** len(sp)

    wf, shift = fold_bn(prm)
    Cin, Cout = L['C'], wf.shape[-1]
    TM, Rout = L['TM'], L['Rout']
    Rg = Rout + 2 * G
    xg = jnp.pad(L['x'].astype(jnp.float32), ((G, G), (0, 0)))  # guarded resident block

    om = L['mask'] if out_mask_rows is None else out_mask_rows
    nt = Rout // TM
    flags = (jnp.max(om[:, 0].reshape(nt, TM), axis=1) > 0.0).astype(jnp.int32)

    args = [flags, offs, xg, wf, shift, om]
    if residual is not None:
        args.append(residual['x'])
    out = _build_shiftconv(TM, Rg, Cin, Cout, KN, Rout, residual is not None)(*args)

    newL = dict(L)
    newL.update(x=out, mask=om, C=Cout)
    return newL


def basic_block(L, p1, p2):
    """SparseBasicBlock: relu(bn2(conv2(relu(bn1(conv1(x))))) + x), same index set."""
    out1 = shift_conv(L, p1)
    out2 = shift_conv(out1, p2, residual=L)
    return out2


def _im2col(x, k, stride, pad):
    spatial = x.shape[1:-1]
    n = len(spatial)
    xp = jnp.pad(x, [(0, 0)] + [(pad, pad)] * n + [(0, 0)])
    out_sp = tuple((d + 2 * pad - k) // stride + 1 for d in spatial)
    cols = []
    for offs in itertools.product(range(k), repeat=n):
        idx = (slice(None),)
        for o, osz in zip(offs, out_sp):
            idx = idx + (slice(o, o + (osz - 1) * stride + 1, stride),)
        idx = idx + (slice(None),)
        cols.append(xp[idx])
    patches = jnp.stack(cols, axis=-2)                        # [B, *out_sp, k^n, C]
    B, C = x.shape[0], x.shape[-1]
    M = B * math.prod(out_sp)
    return patches.reshape(M, (k ** n) * C), out_sp


def down_conv(L, prm, kd, stride):
    """SparseConv3d (stride 2) + BN(eval) + ReLU; mask dilates via strided max-pool."""
    x, mask = from_layout(L)                                  # interior, bf16 / f32
    pd = kd // 2
    patches, out_sp = _im2col(x, kd, stride, pd)
    nsp = x.ndim - 2
    mp = jnp.pad(mask, [(0, 0)] + [(pd, pd)] * nsp)
    out_mask = (lax.reduce_window(mp, 0.0, lax.max,
                                  (1,) + (kd,) * nsp,
                                  (1,) + (stride,) * nsp, 'VALID') > 0).astype(jnp.float32)

    wf, shift = fold_bn(prm)
    KN, Cin, Cout = wf.shape
    wflat = wf.reshape(KN * Cin, Cout)
    B = x.shape[0]
    M = B * math.prod(out_sp)
    K = patches.shape[1]
    TMd = min(512, _round_up(M, 8))
    Mp = _round_up(_round_up(M, 8), TMd)
    xpat = jnp.pad(patches, ((0, Mp - M), (0, 0)))
    mrows = jnp.pad(out_mask.reshape(M, 1), ((0, Mp - M), (0, 0)))
    out = _build_downconv(TMd, Mp, K, Cout)(xpat, wflat, shift, mrows)[:M]
    out = out.reshape((B,) + out_sp + (Cout,))
    return to_layout(out, out_mask, pad=1)


# ----------------------------------------------------------------------------
# Parameters
# ----------------------------------------------------------------------------
def make_conv_params(key, cin, cout, k, ndim, bias, eps):
    k1, k2, k3, k4, k5, k6 = jax.random.split(key, 6)
    kn = k ** ndim
    return dict(
        w=jax.random.normal(k1, (kn, cin, cout), jnp.float32) / math.sqrt(kn * cin),
        gamma=1.0 + 0.1 * jax.random.normal(k2, (cout,), jnp.float32),
        beta=0.1 * jax.random.normal(k3, (cout,), jnp.float32),
        mean=0.01 * jax.random.normal(k4, (cout,), jnp.float32),
        var=1.0 + 0.1 * jax.random.uniform(k5, (cout,), jnp.float32),
        eps=eps,
        conv_bias=(0.1 * jax.random.normal(k6, (cout,), jnp.float32)
                   if bias else jnp.zeros((cout,), jnp.float32)),
    )


def init_params(key, in_ch, channels, out_ch, ksizes):
    keys = iter(jax.random.split(key, 64))
    P = {}
    P['conv_input'] = make_conv_params(next(keys), in_ch, channels[0], 3, 3, False, 1e-3)
    P['conv1_blocks'] = [make_conv_params(next(keys), channels[0], channels[0], 3, 3, True, 1e-3)
                         for _ in range(4)]
    stage_defs = [('conv2', channels[0], channels[1], ksizes[0]),
                  ('conv3', channels[1], channels[2], ksizes[1]),
                  ('conv4', channels[2], channels[3], ksizes[2]),
                  ('conv5', channels[3], channels[4], ksizes[3]),
                  ('conv6', channels[4], channels[4], ksizes[3])]
    for name, cin, cout, kd in stage_defs:
        P[name] = dict(
            k_down=kd,
            down=make_conv_params(next(keys), cin, cout, kd, 3, False, 1e-3),
            blocks=[make_conv_params(next(keys), cout, cout, 3, 3, True, 1e-3) for _ in range(4)],
        )
    P['conv_out'] = make_conv_params(next(keys), channels[3], out_ch, 3, 2, False, 1e-3)
    P['shared'] = make_conv_params(next(keys), out_ch, out_ch, 3, 2, True, 1e-5)
    return P


def _upsample_into(target_shape, src, factor):
    """Scatter src at indices*factor inside a zeros tensor of target_shape."""
    B, Ds, Hs, Ws = src.shape[:4]
    out = jnp.zeros(target_shape, src.dtype)
    sl = (slice(None),
          slice(0, factor * Ds, factor),
          slice(0, factor * Hs, factor),
          slice(0, factor * Ws, factor))
    if src.ndim == 5:
        sl = sl + (slice(None),)
    return out.at[sl].set(src)


# ----------------------------------------------------------------------------
# Forward
# ----------------------------------------------------------------------------
def backbone_forward(voxel_dense, voxel_mask, P):
    L = to_layout(voxel_dense, voxel_mask, pad=1)
    L = shift_conv(L, P['conv_input'])
    L = basic_block(L, P['conv1_blocks'][0], P['conv1_blocks'][1])
    L = basic_block(L, P['conv1_blocks'][2], P['conv1_blocks'][3])
    L1 = L

    def stage(Ls, sp):
        Ls = down_conv(Ls, sp['down'], sp['k_down'], 2)
        Ls = basic_block(Ls, sp['blocks'][0], sp['blocks'][1])
        Ls = basic_block(Ls, sp['blocks'][2], sp['blocks'][3])
        return Ls

    L2 = stage(L1, P['conv2'])
    L3 = stage(L2, P['conv3'])
    L4 = stage(L3, P['conv4'])
    L5 = stage(L4, P['conv5'])
    L6 = stage(L5, P['conv6'])

    x4, m4 = from_layout(L4)
    x5, m5 = from_layout(L5)
    x6, m6 = from_layout(L6)

    # x_conv5.indices *= 2, x_conv6.indices *= 4, concat into x_conv4 (duplicates sum)
    up5 = _upsample_into(x4.shape, x5, 2)
    up6 = _upsample_into(x4.shape, x6, 4)
    m5u = _upsample_into(m4.shape, m5, 2)
    m6u = _upsample_into(m4.shape, m6, 4)
    merged = x4.astype(jnp.float32) + up5.astype(jnp.float32) + up6.astype(jnp.float32)
    mmerged = jnp.maximum(m4, jnp.maximum(m5u, m6u))

    # bev_out: unique over (b, y, x) with index_add over z == sum over z
    bev = zsum_bev(merged)
    mbev = jnp.max(mmerged, axis=1)

    # conv_out: SparseConv2d(3, s=1, p=1) + BN + ReLU (output mask = dilated mask)
    Lb = to_layout(bev, mbev, pad=1)
    om_rows = _mask_rows(dilate_mask_same(mbev, 3), 1, Lb['Rout'])
    Lb = shift_conv(Lb, P['conv_out'], out_mask_rows=om_rows)
    # shared_conv: SubMConv2d(3, bias=True) + BN + ReLU (same index set)
    Lb = shift_conv(Lb, P['shared'])
    out_bev, out_mask = from_layout(Lb)

    x1, m1 = from_layout(L1)
    x2, m2 = from_layout(L2)
    x3, m3 = from_layout(L3)
    multi_scale = {'x_conv1': (x1, m1), 'x_conv2': (x2, m2),
                   'x_conv3': (x3, m3), 'x_conv4': (merged, mmerged)}
    return out_bev, out_mask, multi_scale


# ----------------------------------------------------------------------------
if __name__ == "__main__":
    key = jax.random.PRNGKey(0)
    k_mask, k_feat, k_par = jax.random.split(key, 3)

    # model config (defaults of the module)
    input_channels = 4
    channels = [16, 32, 64, 128, 128]
    out_channel = 128
    spconv_kernel_sizes = [3, 3, 3, 3]
    grid_size = [32, 32, 7]                                        # [x, y, z]
    sparse_shape = [grid_size[2] + 1, grid_size[1], grid_size[0]]  # [D=8, H=32, W=32]
    batch_size = 2

    B, D, H, W = batch_size, *sparse_shape
    # synthetic sparse voxel input: ~20% occupancy; dense repr, zeros at inactive voxels
    voxel_mask = (jax.random.uniform(k_mask, (B, D, H, W)) < 0.2).astype(jnp.float32)
    voxel_dense = (jax.random.normal(k_feat, (B, D, H, W, input_channels), jnp.float32)
                   * voxel_mask[..., None])

    params = init_params(k_par, input_channels, channels, out_channel, spconv_kernel_sizes)

    out_bev, out_mask, multi_scale = backbone_forward(voxel_dense, voxel_mask, params)
    jax.block_until_ready(out_bev)

    assert out_bev.shape == (B, H // 8, W // 8, out_channel)
    assert out_mask.shape == (B, H // 8, W // 8)
    assert bool(jnp.isfinite(out_bev.astype(jnp.float32)).all())
    print("KERNEL_OK")
</pallas_src>

<mosaic_0001>
module attributes {stable_mosaic.version = 11 : i64} {
  func.func @kernel(%arg0: i32, %arg1: i32, %arg2: memref<46xi32, #tpu.memory_space<smem>>, %arg3: memref<27xi32, #tpu.memory_space<smem>>, %arg4: memref<25934x4xf32, #tpu.memory_space<vmem>>, %arg5: memref<1x4x16xbf16, #tpu.memory_space<vmem>>, %arg6: memref<1x16xf32, #tpu.memory_space<vmem>>, %arg7: memref<512x1xf32, #tpu.memory_space<vmem>>, %arg8: memref<512x16xbf16, #tpu.memory_space<vmem>>, %arg9: memref<512x16xf32, #tpu.memory_space<vmem>>) attributes {dimension_semantics = [#tpu.dimension_semantics<parallel>, #tpu.dimension_semantics<arbitrary>], iteration_bounds = array<i64: 46, 27>, scalar_prefetch = 2 : i64, scratch_operands = 1 : i64, tpu.core_type = #tpu.core_type<tc>, window_params = [{pipeline_mode = #tpu.pipeline_mode<synchronous>, transform_indices = @transform_0, window_bounds = array<i64: 25934, 4>}, {transform_indices = @transform_1, window_bounds = array<i64: 1, 4, 16>}, {pipeline_mode = #tpu.pipeline_mode<synchronous>, transform_indices = @transform_2, window_bounds = array<i64: 1, 16>}, {transform_indices = @transform_3, window_bounds = array<i64: 512, 1>}, {transform_indices = @transform_4, window_bounds = array<i64: 512, 16>}]} {
    %c0_i32 = arith.constant 0 : i32
    %0 = arith.cmpi eq, %arg1, %c0_i32 : i32
    %1 = arith.extui %0 : i1 to i32
    %c0_i32_0 = arith.constant 0 : i32
    %2 = arith.cmpi ne, %1, %c0_i32_0 : i32
    scf.if %2 {
      %cst = arith.constant 0.000000e+00 : f32
      %11 = vector.broadcast %cst : f32 to vector<512x16xf32>
      %c0 = arith.constant 0 : index
      %c0_4 = arith.constant 0 : index
      %12 = vector.load %arg9[%c0, %c0_4] : memref<512x16xf32, #tpu.memory_space<vmem>>, vector<512x16xf32>
      tpu.vector_store %arg9[%c0, %c0_4], %11 {strides = array<i32>} : memref<512x16xf32, #tpu.memory_space<vmem>>, vector<512x16xf32>,
    } else {
    }
    %3 = arith.index_cast %arg0 : i32 to index
    %4 = memref.load %arg2[%3] : memref<46xi32, #tpu.memory_space<smem>>
    %c0_i32_1 = arith.constant 0 : i32
    %5 = arith.cmpi ne, %4, %c0_i32_1 : i32
    %6 = arith.extui %5 : i1 to i32
    %c0_i32_2 = arith.constant 0 : i32
    %7 = arith.cmpi ne, %6, %c0_i32_2 : i32
    scf.if %7 {
      %c512_i32 = arith.constant 512 : i32
      %11 = arith.muli %arg0, %c512_i32 : i32
      %12 = arith.index_cast %arg1 : i32 to index
      %13 = memref.load %arg3[%12] : memref<27xi32, #tpu.memory_space<smem>>
      %14 = arith.addi %11, %13 : i32
      %15 = arith.index_cast %14 : i32 to index
      %c0 = arith.constant 0 : index
      %16 = vector.load %arg4[%15, %c0] : memref<25934x4xf32, #tpu.memory_space<vmem>>, vector<512x4xf32>
      %17 = arith.truncf %16 : vector<512x4xf32> to vector<512x4xbf16>
      %c0_4 = arith.constant 0 : index
      %c0_5 = arith.constant 0 : index
      %18 = vector.load %arg9[%c0_4, %c0_5] : memref<512x16xf32, #tpu.memory_space<vmem>>, vector<512x16xf32>
      %c0_6 = arith.constant 0 : index
      %c0_7 = arith.constant 0 : index
      %c0_8 = arith.constant 0 : index
      %19 = vector.load %arg5[%c0_6, %c0_7, %c0_8] : memref<1x4x16xbf16, #tpu.memory_space<vmem>>, vector<1x4x16xbf16>
      %20 = vector.shape_cast %19 : vector<1x4x16xbf16> to vector<4x16xbf16>
      %cst = arith.constant dense<0.000000e+00> : vector<512x16xf32>
      %21 = tpu.matmul %17, %20, %cst {dimension_numbers = #tpu.dot_dimension_numbers<[1], [0], [0], [1], [0, 0, 1, 1], [], []>} : vector<512x4xbf16>, vector<4x16xbf16>, vector<512x16xf32> -> vector<512x16xf32>
      %22 = arith.addf %18, %21 : vector<512x16xf32>
      %c0_9 = arith.constant 0 : index
      %c0_10 = arith.constant 0 : index
      %23 = vector.load %arg9[%c0_9, %c0_10] : memref<512x16xf32, #tpu.memory_space<vmem>>, vector<512x16xf32>
      tpu.vector_store %arg9[%c0_9, %c0_10], %22 {strides = array<i32>} : memref<512x16xf32, #tpu.memory_space<vmem>>, vector<512x16xf32>,
    } else {
    }
    %c26_i32 = arith.constant 26 : i32
    %8 = arith.cmpi eq, %arg1, %c26_i32 : i32
    %9 = arith.extui %8 : i1 to i32
    %c0_i32_3 = arith.constant 0 : i32
    %10 = arith.cmpi ne, %9, %c0_i32_3 : i32
    scf.if %10 {
      %c0 = arith.constant 0 : index
      %c0_4 = arith.constant 0 : index
      %11 = vector.load %arg9[%c0, %c0_4] : memref<512x16xf32, #tpu.memory_space<vmem>>, vector<512x16xf32>
      %c0_5 = arith.constant 0 : index
      %c0_6 = arith.constant 0 : index
      %12 = vector.load %arg6[%c0_5, %c0_6] : memref<1x16xf32, #tpu.memory_space<vmem>>, vector<1x16xf32>
      %13 = vector.broadcast %12 : vector<1x16xf32> to vector<512x16xf32>
      %14 = arith.addf %11, %13 : vector<512x16xf32>
      %cst = arith.constant 0.000000e+00 : f32
      %15 = vector.broadcast %cst : f32 to vector<512x16xf32>
      %16 = arith.maximumf %14, %15 : vector<512x16xf32>
      %c0_7 = arith.constant 0 : index
      %c0_8 = arith.constant 0 : index
      %17 = vector.load %arg7[%c0_7, %c0_8] : memref<512x1xf32, #tpu.memory_space<vmem>>, vector<512x1xf32>
      %18 = vector.broadcast %17 : vector<512x1xf32> to vector<512x16xf32>
      %19 = arith.mulf %16, %18 : vector<512x16xf32>
      %20 = arith.truncf %19 : vector<512x16xf32> to vector<512x16xbf16>
      %c0_9 = arith.constant 0 : index
      %c0_10 = arith.constant 0 : index
      %21 = vector.load %arg8[%c0_9, %c0_10] : memref<512x16xbf16, #tpu.memory_space<vmem>>, vector<512x16xbf16>
      tpu.vector_store %arg8[%c0_9, %c0_10], %20 {strides = array<i32>} : memref<512x16xbf16, #tpu.memory_space<vmem>>, vector<512x16xbf16>,
    } else {
    }
    return
  }
  func.func @transform_0(%arg0: i32, %arg1: i32, %arg2: memref<46xi32, #tpu.memory_space<smem>>, %arg3: memref<27xi32, #tpu.memory_space<smem>>) -> (i32, i32) {
    %c0_i32 = arith.constant 0 : i32
    %c0_i32_0 = arith.constant 0 : i32
    %c0_i32_1 = arith.constant 0 : i32
    return %c0_i32, %c0_i32_0 : i32, i32
  }
  func.func @transform_1(%arg0: i32, %arg1: i32, %arg2: memref<46xi32, #tpu.memory_space<smem>>, %arg3: memref<27xi32, #tpu.memory_space<smem>>) -> (i32, i32, i32) {
    %c0_i32 = arith.constant 0 : i32
    %c0_i32_0 = arith.constant 0 : i32
    %c0_i32_1 = arith.constant 0 : i32
    return %arg1, %c0_i32, %c0_i32_0 : i32, i32, i32
  }
  func.func @transform_2(%arg0: i32, %arg1: i32, %arg2: memref<46xi32, #tpu.memory_space<smem>>, %arg3: memref<27xi32, #tpu.memory_space<smem>>) -> (i32, i32) {
    %c0_i32 = arith.constant 0 : i32
    %c0_i32_0 = arith.constant 0 : i32
    %c0_i32_1 = arith.constant 0 : i32
    return %c0_i32, %c0_i32_0 : i32, i32
  }
  func.func @transform_3(%arg0: i32, %arg1: i32, %arg2: memref<46xi32, #tpu.memory_space<smem>>, %arg3: memref<27xi32, #tpu.memory_space<smem>>) -> (i32, i32) {
    %c0_i32 = arith.constant 0 : i32
    %c0_i32_0 = arith.constant 0 : i32
    return %arg0, %c0_i32 : i32, i32
  }
  func.func @transform_4(%arg0: i32, %arg1: i32, %arg2: memref<46xi32, #tpu.memory_space<smem>>, %arg3: memref<27xi32, #tpu.memory_space<smem>>) -> (i32, i32) {
    %c0_i32 = arith.constant 0 : i32
    %c0_i32_0 = arith.constant 0 : i32
    return %arg0, %c0_i32 : i32, i32
  }
}

</mosaic_0001>

<llo_original>
// kernel: tpu_custom_call.1
$region0: #{tpu_custom_call.1}
  #allocation0 [shape = 'u32[]', space=smem, size = 0x4, offset = 0x4, fixed_abs, tag = 'smem constant byte address 0x4 - core index']
  #allocation1 [shape = 'u32[144,128]{1,0:T(1,128)}', space=vmem, size = 0x12000, scoped, tag = 'internal scratch']
  #allocation2 [shape = 'f32[512,16]{1,0:T(8,128)}', space=vmem, size = 0x40000, scoped, tag = 'scratch operand']
  #allocation3 [shape = 's32[1]{0}', space=sflag, size = 0x4, scoped, tag = 'scoped memory for tpu_custom_call.1']
  #allocation4 [shape = 'u8[512]{0}', space=smem, size = 0x200, scoped, tag = 'prefetched SMEM operand 0']
  #allocation5 [shape = 'u8[512]{0}', space=smem, size = 0x200, scoped, tag = 'prefetched SMEM operand 1']
  %s0 = inlined_call_operand.vmem [shape: s32[46], index: 0, kind: input, shape index: {}]
  %s1 = inlined_call_operand.vmem [shape: s32[27], index: 1, kind: input, shape index: {}]
  %s2 = inlined_call_operand.vmem [shape: f32[25934,4], index: 2, kind: input, shape index: {}]
  %s3 = inlined_call_operand.vmem [shape: bf16[27,4,16], index: 3, kind: input, shape index: {}]
  %s4 = inlined_call_operand.vmem [shape: f32[1,16], index: 4, kind: input, shape index: {}]
  %s5 = inlined_call_operand.hbm [shape: f32[23552,1], index: 5, kind: input, shape index: {}]
  %s6 = inlined_call_operand.hbm [shape: bf16[23552,16], index: 6, kind: output, shape index: {}]
  %s7 = sld [smem:[#allocation0]]
  $region65: #{tpu_custom_call.1} parent=0
    _
  %s9 = ssub.s32 1, %s7
  %s10 = scalar_select 0, %s9, %s7
  %s11 = sshll.u32 %s0, 4
  %s12 = int_to_ptr.vmem [resolvable:$true] %s11
  %14 = dma.vmem_to_smem %s12, 16, [#allocation4], [#allocation3]
  %s15 = sshll.u32 %s1, 4
  %s16 = int_to_ptr.vmem [resolvable:$true] %s15
  %18 = dma.vmem_to_smem %s16, 16, [#allocation5], [#allocation3]
  %19 = dma.done [#allocation3], 32
  %20 = sfence
  $region1: #{tpu_custom_call.1} parent=0
    #allocation6 [shape = 'u8[524288]{0}', space=vmem, size = 0x80000, scoped, tag = 'input window, operand 5']
    #allocation7 [shape = 's32[2]{0}', space=sflag, size = 0x8, scoped, tag = 'scoped memory for tpu_custom_call.1']
    #allocation8 [shape = 's32[2]{0}', space=sflag, size = 0x8, scoped, tag = 'scoped memory for tpu_custom_call.1']
    #allocation9 [shape = 'u8[262144]{0}', space=vmem, size = 0x40000, scoped, tag = 'output window, operand 0']
    %21 = vsyncpa [#allocation7], 0
    %s22 = scalar_lea.sflag [#allocation7], 1
    %23 = vsyncpa %s22, 0
    %24 = vsyncpa [#allocation8], 0
    %s25 = scalar_lea.sflag [#allocation8], 1
    %26 = vsyncpa %s25, 0
    loop: start=0, step=1, limit=1244
    $region2: #{tpu_custom_call.1} parent=1 // loop_pre_header
      _
    $region3: #{tpu_custom_call.1} parent=1 // loop_header
      %s28 = sphi 0, %s32
      %p29 = scmp.ge.s32.totalorder %s28, 1244
      %s35 = sphi 0, %s47
      %s36 = sphi 0, %s43
      %s37 = sphi 0, %s35
      %s38 = sphi 0, %s36
      %s39 = sphi 0, %s37
      %s40 = sphi 0, %s38
      %s48 = sphi 0, %s48
      %s50 = sphi 0, %s48
      %s51 = sphi 0, %s50
      %s65 = sphi 0, %s51
      %s71 = sphi 0, %s73
      %s74 = sphi 0, %s71
      %s75 = sphi 0, %s74
      %s91 = sphi 0, %s75
      %s95 = sphi 0, %s95
      %s97 = sphi 0, %s95
      %s98 = sphi 0, %s97
      %s112 = sphi 0, %s98
      %s118 = sphi 0, %s120
      %s121 = sphi 0, %s118
      %s122 = sphi 0, %s121
      %s138 = sphi 0, %s122
      %s144 = sphi 0, %s146
      %s147 = sphi 0, %s144
      %s148 = sphi 0, %s147
      %s164 = sphi 0, %s148
    $region4: #{tpu_custom_call.1} parent=1 // loop_header_branch
      %31 = sbr.rel (%p29) target = $region8
    $region5: #{tpu_custom_call.1} parent=1 // loop_body
      %s33 = ssub.s32 %s28, 1
      %s34 = ssub.s32 %s28, 2
      %s41 = sadd.s32 1, %s36
      %p42 = scmp.ge.s32.totalorder %s41, 27
      %s43 = scalar_select %p42, 0, %s41
      %s44 = sadd.s32 1, %s35
      %s45 = scalar_select %p42, %s44, %s35
      %p46 = scmp.ge.s32.totalorder %s45, 46
      %s47 = scalar_select %p46, 0, %s45
      %s49 = sadd.s32 %s48, 1
      %p52 = scmp.eq.s32.totalorder %s28, 1241
      %p53 = scmp.ne.s32.totalorder %s48, %s50
      %p54 = scmp.eq.s32.totalorder %s28, 0
      %p55 = por %p53, %p54
      %p56 = scmp.ne.s32.totalorder %s48, %s50
      %p57 = scmp.eq.s32.totalorder %s33, 1241
      %p58 = por %p56, %p57
      %p59 = scmp.ne.s32.totalorder %s50, %s51
      %p60 = scmp.eq.s32.totalorder %s33, 0
      %p61 = por %p59, %p60
      %p62 = scmp.ne.s32.totalorder %s50, %s51
      %p63 = scmp.eq.s32.totalorder %s34, 1241
      %p64 = por %p62, %p63
      %p66 = scmp.ne.s32.totalorder %s51, %s65
      %p67 = scmp.eq.s32.totalorder %s34, 0
      %p68 = por %p66, %p67
      %s69 = ssub.s32 %s36, %s43
      %p70 = scmp.eq.s32.totalorder %s69, 0
      %s72 = sadd.s32 %s71, 1
      %s73 = scalar_select %p70, %s71, %s72
      %p76 = pneg %p70
      %p77 = scmp.eq.s32.totalorder %s28, 1241
      %p78 = por %p76, %p77
      %p79 = scmp.ne.s32.totalorder %s71, %s74
      %p80 = scmp.eq.s32.totalorder %s28, 0
      %p81 = por %p79, %p80
      %p82 = scmp.ne.s32.totalorder %s71, %s74
      %p83 = scmp.eq.s32.totalorder %s33, 1241
      %p84 = por %p82, %p83
      %p85 = scmp.ne.s32.totalorder %s74, %s75
      %p86 = scmp.eq.s32.totalorder %s33, 0
      %p87 = por %p85, %p86
      %p88 = scmp.ne.s32.totalorder %s74, %s75
      %p89 = scmp.eq.s32.totalorder %s34, 1241
      %p90 = por %p88, %p89
      %p92 = scmp.ne.s32.totalorder %s75, %s91
      %p93 = scmp.eq.s32.totalorder %s34, 0
      %p94 = por %p92, %p93
      %s96 = sadd.s32 %s95, 1
      %p99 = scmp.eq.s32.totalorder %s28, 1241
      %p100 = scmp.ne.s32.totalorder %s95, %s97
      %p101 = scmp.eq.s32.totalorder %s28, 0
      %p102 = por %p100, %p101
      %p103 = scmp.ne.s32.totalorder %s95, %s97
      %p104 = scmp.eq.s32.totalorder %s33, 1241
      %p105 = por %p103, %p104
      %p106 = scmp.ne.s32.totalorder %s97, %s98
      %p107 = scmp.eq.s32.totalorder %s33, 0
      %p108 = por %p106, %p107
      %p109 = scmp.ne.s32.totalorder %s97, %s98
      %p110 = scmp.eq.s32.totalorder %s34, 1241
      %p111 = por %p109, %p110
      %p113 = scmp.ne.s32.totalorder %s98, %s112
      %p114 = scmp.eq.s32.totalorder %s34, 0
      %p115 = por %p113, %p114
      %s116 = ssub.s32 %s35, %s47
      %p117 = scmp.eq.s32.totalorder %s116, 0
      %s119 = sadd.s32 %s118, 1
      %s120 = scalar_select %p117, %s118, %s119
      %p123 = pneg %p117
      %p124 = scmp.eq.s32.totalorder %s28, 1241
      %p125 = por %p123, %p124
      %p126 = scmp.ne.s32.totalorder %s118, %s121
      %p127 = scmp.eq.s32.totalorder %s28, 0
      %p128 = por %p126, %p127
      %p129 = scmp.ne.s32.totalorder %s118, %s121
      %p130 = scmp.eq.s32.totalorder %s33, 1241
      %p131 = por %p129, %p130
      %p132 = scmp.ne.s32.totalorder %s121, %s122
      %p133 = scmp.eq.s32.totalorder %s33, 0
      %p134 = por %p132, %p133
      %p135 = scmp.ne.s32.totalorder %s121, %s122
      %p136 = scmp.eq.s32.totalorder %s34, 1241
      %p137 = por %p135, %p136
      %p139 = scmp.ne.s32.totalorder %s122, %s138
      %p140 = scmp.eq.s32.totalorder %s34, 0
      %p141 = por %p139, %p140
      %s142 = ssub.s32 %s35, %s47
      %p143 = scmp.eq.s32.totalorder %s142, 0
      %s145 = sadd.s32 %s144, 1
      %s146 = scalar_select %p143, %s144, %s145
      %p149 = pneg %p143
      %p150 = scmp.eq.s32.totalorder %s28, 1241
      %p151 = por %p149, %p150
      %p152 = scmp.ne.s32.totalorder %s144, %s147
      %p153 = scmp.eq.s32.totalorder %s28, 0
      %p154 = por %p152, %p153
      %p155 = scmp.ne.s32.totalorder %s144, %s147
      %p156 = scmp.eq.s32.totalorder %s33, 1241
      %p157 = por %p155, %p156
      %p158 = scmp.ne.s32.totalorder %s147, %s148
      %p159 = scmp.eq.s32.totalorder %s33, 0
      %p160 = por %p158, %p159
      %p161 = scmp.ne.s32.totalorder %s147, %s148
      %p162 = scmp.eq.s32.totalorder %s34, 1241
      %p163 = por %p161, %p162
      %p165 = scmp.ne.s32.totalorder %s148, %s164
      %p166 = scmp.eq.s32.totalorder %s34, 0
      %p167 = por %p165, %p166
      %p168 = scmp.le.s32.totalorder 1, %s28
      %p169 = scmp.lt.s32.totalorder %s28, 1243
      %p170 = pnand %p168, %p169
      %p171 = pneg %p170
      // Predicated region
      $region9: #{tpu_custom_call.1} parent=5 // pred_check
        _
      $region10: #{tpu_custom_call.1} parent=5 // pred_check_branch
        %173 = sbr.rel (%p170) target = $region12
      $region11: #{tpu_custom_call.1} parent=5 // pred_region
        %s174 = ssub.s32 %s28, 1
        // Predicated region
        $region13: #{tpu_custom_call.1} parent=11 // pred_check
          %p175 = pneg %p61
        $region14: #{tpu_custom_call.1} parent=11 // pred_check_branch
          %177 = sbr.rel (%p175) target = $region16
        $region15: #{tpu_custom_call.1} parent=11 // pred_region
          _
        $region16: #{tpu_custom_call.1} parent=11 // pred_fallthru
          _
        // Predicated region
        $region17: #{tpu_custom_call.1} parent=11 // pred_check
          %p178 = pneg %p108
        $region18: #{tpu_custom_call.1} parent=11 // pred_check_branch
          %180 = sbr.rel (%p178) target = $region20
        $region19: #{tpu_custom_call.1} parent=11 // pred_region
          _
        $region20: #{tpu_custom_call.1} parent=11 // pred_fallthru
          _
      $region12: #{tpu_custom_call.1} parent=5 // pred_fallthru
        _
      %p181 = scmp.lt.s32.totalorder %s28, 1242
      // Predicated region
      $region21: #{tpu_custom_call.1} parent=5 // pred_check
        %p182 = pneg %p181
      $region22: #{tpu_custom_call.1} parent=5 // pred_check_branch
        %184 = sbr.rel (%p182) target = $region24
      $region23: #{tpu_custom_call.1} parent=5 // pred_region
        // Predicated region
        $region25: #{tpu_custom_call.1} parent=23 // pred_check
          %p185 = pneg %p81
        $region26: #{tpu_custom_call.1} parent=23 // pred_check_branch
          %187 = sbr.rel (%p185) target = $region28
        $region27: #{tpu_custom_call.1} parent=23 // pred_region
          %p188 = scmp.lt.s32.totalorder %s36, 26
          %s189 = scalar_select %p188, %s36, 26
          %s190 = smul.addr %s189, 2
          %s191 = scalar_lea.vmem %s3, %s190
        $region28: #{tpu_custom_call.1} parent=23 // pred_fallthru
          _
        // Predicated region
        $region29: #{tpu_custom_call.1} parent=23 // pred_check
          %p192 = pneg %p128
        $region30: #{tpu_custom_call.1} parent=23 // pred_check_branch
          %194 = sbr.rel (%p192) target = $region32
        $region31: #{tpu_custom_call.1} parent=23 // pred_region
          %s195 = sand.u32 %s118, 1
          %s196 = scalar_lea.sflag [#allocation7], %s195
          %s197 = sand.u32 %s118, 1
          %s198 = smul.addr %s197, 512
          %s199 = scalar_lea.vmem [#allocation6], %s198
          %s200 = smul.u32 64, %s35
          %s202 = ssub.s32 8192, 8192
          %203 = vsyncadd %s196, %s202
          %s204 = smul.addr %s200, 128
          %s205 = scalar_lea.hbm %s5, %s204
          %s206 = sshll.u32 %s199, 4
          %s207 = int_to_ptr.vmem [resolvable:$true] %s206
          %212 = dma.hbm_to_vmem [thread:$0]  %s205, 8192, %s207, %s196, 128, 128, 8
        $region32: #{tpu_custom_call.1} parent=23 // pred_fallthru
          _
      $region24: #{tpu_custom_call.1} parent=5 // pred_fallthru
        _
      %p213 = scmp.le.s32.totalorder 1, %s28
      %p214 = scmp.lt.s32.totalorder %s28, 1243
      %p215 = pnand %p213, %p214
      %p216 = pneg %p215
      // Predicated region
      $region33: #{tpu_custom_call.1} parent=5 // pred_check
        _
      $region34: #{tpu_custom_call.1} parent=5 // pred_check_branch
        %218 = sbr.rel (%p215) target = $region36
      $region35: #{tpu_custom_call.1} parent=5 // pred_region
        %s219 = ssub.s32 %s28, 1
        %s220 = sand.u32 %s121, 1
        %s221 = scalar_lea.sflag [#allocation7], %s220
        %s222 = sand.u32 %s121, 1
        %s223 = smul.addr %s222, 512
        %s224 = scalar_lea.vmem [#allocation6], %s223
        // Predicated region
        $region37: #{tpu_custom_call.1} parent=35 // pred_check
          %p225 = pneg %p134
        $region38: #{tpu_custom_call.1} parent=35 // pred_check_branch
          %227 = sbr.rel (%p225) target = $region40
        $region39: #{tpu_custom_call.1} parent=35 // pred_region
          %228 = dma.done %s221, 8192
        $region40: #{tpu_custom_call.1} parent=35 // pred_fallthru
          _
        %p229 = pneg %p61
        %p230 = pneg %p58
        %p231 = scmp.lt.s32.totalorder %s38, 26
        %s232 = scalar_select %p231, %s38, 26
        %s233 = smul.addr %s232, 2
        %s234 = scalar_lea.vmem %s3, %s233
        %p235 = pneg %p87
        %p236 = pneg %p84
        %p237 = pneg %p108
        %p238 = pneg %p105
        %s239 = sand.u32 %s121, 1
        %s240 = scalar_lea.sflag [#allocation7], %s239
        %s241 = sand.u32 %s121, 1
        %s242 = smul.addr %s241, 512
        %s243 = scalar_lea.vmem [#allocation6], %s242
        %p244 = pneg %p134
        %p245 = pneg %p131
        %p246 = pneg %p160
        %p247 = pneg %p157
        %s248 = sand.u32 %s147, 1
        %s249 = scalar_lea.sflag [#allocation8], %s248
        %s250 = sand.u32 %s147, 1
        %s251 = smul.addr %s250, 256
        %s252 = scalar_lea.vmem [#allocation9], %s251
        %p253 = scmp.lt.s32.totalorder %s38, 26
        %s254 = scalar_select %p253, %s38, 26
        %s255 = smul.addr %s254, 2
        %s256 = scalar_lea.vmem %s3, %s255
        %s257 = smul.u32 64, %s37
        %s258 = smul.u32 64, %s37
        %p260 = scmp.eq.s32.totalorder %s38, 0
        // Predicated region
        $region41: #{tpu_custom_call.1} parent=35 // pred_check
          %p261 = pneg %p260
        $region42: #{tpu_custom_call.1} parent=35 // pred_check_branch
          %263 = sbr.rel (%p261) target = $region44
        $region43: #{tpu_custom_call.1} parent=35 // pred_region
          %vm264 = vcmask 130048
          %265 = vst.msk [vmem:[#allocation2] sm:$0xff] %vm264, 0.0
          %266 = vst.msk [vmem:[#allocation2 + $0x8] sm:$0xff] %vm264, 0.0
          %267 = vst.msk [vmem:[#allocation2 + $0x10] sm:$0xff] %vm264, 0.0
          %268 = vst.msk [vmem:[#allocation2 + $0x18] sm:$0xff] %vm264, 0.0
          %269 = vst.msk [vmem:[#allocation2 + $0x20] sm:$0xff] %vm264, 0.0
          %270 = vst.msk [vmem:[#allocation2 + $0x28] sm:$0xff] %vm264, 0.0
          %271 = vst.msk [vmem:[#allocation2 + $0x30] sm:$0xff] %vm264, 0.0
          %272 = vst.msk [vmem:[#allocation2 + $0x38] sm:$0xff] %vm264, 0.0
          %273 = vst.msk [vmem:[#allocation2 + $0x40] sm:$0xff] %vm264, 0.0
          %274 = vst.msk [vmem:[#allocation2 + $0x48] sm:$0xff] %vm264, 0.0
          %275 = vst.msk [vmem:[#allocation2 + $0x50] sm:$0xff] %vm264, 0.0
          %276 = vst.msk [vmem:[#allocation2 + $0x58] sm:$0xff] %vm264, 0.0
          %277 = vst.msk [vmem:[#allocation2 + $0x60] sm:$0xff] %vm264, 0.0
          %278 = vst.msk [vmem:[#allocation2 + $0x68] sm:$0xff] %vm264, 0.0
          %279 = vst.msk [vmem:[#allocation2 + $0x70] sm:$0xff] %vm264, 0.0
          %280 = vst.msk [vmem:[#allocation2 + $0x78] sm:$0xff] %vm264, 0.0
          %281 = vst.msk [vmem:[#allocation2 + $0x80] sm:$0xff] %vm264, 0.0
          %282 = vst.msk [vmem:[#allocation2 + $0x88] sm:$0xff] %vm264, 0.0
          %283 = vst.msk [vmem:[#allocation2 + $0x90] sm:$0xff] %vm264, 0.0
          %284 = vst.msk [vmem:[#allocation2 + $0x98] sm:$0xff] %vm264, 0.0
          %285 = vst.msk [vmem:[#allocation2 + $0xa0] sm:$0xff] %vm264, 0.0
          %286 = vst.msk [vmem:[#allocation2 + $0xa8] sm:$0xff] %vm264, 0.0
          %287 = vst.msk [vmem:[#allocation2 + $0xb0] sm:$0xff] %vm264, 0.0
          %288 = vst.msk [vmem:[#allocation2 + $0xb8] sm:$0xff] %vm264, 0.0
          %289 = vst.msk [vmem:[#allocation2 + $0xc0] sm:$0xff] %vm264, 0.0
          %290 = vst.msk [vmem:[#allocation2 + $0xc8] sm:$0xff] %vm264, 0.0
          %291 = vst.msk [vmem:[#allocation2 + $0xd0] sm:$0xff] %vm264, 0.0
          %292 = vst.msk [vmem:[#allocation2 + $0xd8] sm:$0xff] %vm264, 0.0
          %293 = vst.msk [vmem:[#allocation2 + $0xe0] sm:$0xff] %vm264, 0.0
          %294 = vst.msk [vmem:[#allocation2 + $0xe8] sm:$0xff] %vm264, 0.0
          %295 = vst.msk [vmem:[#allocation2 + $0xf0] sm:$0xff] %vm264, 0.0
          %296 = vst.msk [vmem:[#allocation2 + $0xf8] sm:$0xff] %vm264, 0.0
          %297 = vst.msk [vmem:[#allocation2 + $0x100] sm:$0xff] %vm264, 0.0
          %298 = vst.msk [vmem:[#allocation2 + $0x108] sm:$0xff] %vm264, 0.0
          %299 = vst.msk [vmem:[#allocation2 + $0x110] sm:$0xff] %vm264, 0.0
          %300 = vst.msk [vmem:[#allocation2 + $0x118] sm:$0xff] %vm264, 0.0
          %301 = vst.msk [vmem:[#allocation2 + $0x120] sm:$0xff] %vm264, 0.0
          %302 = vst.msk [vmem:[#allocation2 + $0x128] sm:$0xff] %vm264, 0.0
          %303 = vst.msk [vmem:[#allocation2 + $0x130] sm:$0xff] %vm264, 0.0
          %304 = vst.msk [vmem:[#allocation2 + $0x138] sm:$0xff] %vm264, 0.0
          %305 = vst.msk [vmem:[#allocation2 + $0x140] sm:$0xff] %vm264, 0.0
          %306 = vst.msk [vmem:[#allocation2 + $0x148] sm:$0xff] %vm264, 0.0
          %307 = vst.msk [vmem:[#allocation2 + $0x150] sm:$0xff] %vm264, 0.0
          %308 = vst.msk [vmem:[#allocation2 + $0x158] sm:$0xff] %vm264, 0.0
          %309 = vst.msk [vmem:[#allocation2 + $0x160] sm:$0xff] %vm264, 0.0
          %310 = vst.msk [vmem:[#allocation2 + $0x168] sm:$0xff] %vm264, 0.0
          %311 = vst.msk [vmem:[#allocation2 + $0x170] sm:$0xff] %vm264, 0.0
          %312 = vst.msk [vmem:[#allocation2 + $0x178] sm:$0xff] %vm264, 0.0
          %313 = vst.msk [vmem:[#allocation2 + $0x180] sm:$0xff] %vm264, 0.0
          %314 = vst.msk [vmem:[#allocation2 + $0x188] sm:$0xff] %vm264, 0.0
          %315 = vst.msk [vmem:[#allocation2 + $0x190] sm:$0xff] %vm264, 0.0
          %316 = vst.msk [vmem:[#allocation2 + $0x198] sm:$0xff] %vm264, 0.0
          %317 = vst.msk [vmem:[#allocation2 + $0x1a0] sm:$0xff] %vm264, 0.0
          %318 = vst.msk [vmem:[#allocation2 + $0x1a8] sm:$0xff] %vm264, 0.0
          %319 = vst.msk [vmem:[#allocation2 + $0x1b0] sm:$0xff] %vm264, 0.0
          %320 = vst.msk [vmem:[#allocation2 + $0x1b8] sm:$0xff] %vm264, 0.0
          %321 = vst.msk [vmem:[#allocation2 + $0x1c0] sm:$0xff] %vm264, 0.0
          %322 = vst.msk [vmem:[#allocation2 + $0x1c8] sm:$0xff] %vm264, 0.0
          %323 = vst.msk [vmem:[#allocation2 + $0x1d0] sm:$0xff] %vm264, 0.0
          %324 = vst.msk [vmem:[#allocation2 + $0x1d8] sm:$0xff] %vm264, 0.0
          %325 = vst.msk [vmem:[#allocation2 + $0x1e0] sm:$0xff] %vm264, 0.0
          %326 = vst.msk [vmem:[#allocation2 + $0x1e8] sm:$0xff] %vm264, 0.0
          %327 = vst.msk [vmem:[#allocation2 + $0x1f0] sm:$0xff] %vm264, 0.0
          %328 = vst.msk [vmem:[#allocation2 + $0x1f8] sm:$0xff] %vm264, 0.0
        $region44: #{tpu_custom_call.1} parent=35 // pred_fallthru
          _
        %s329 = sld [smem:[#allocation4 + %s37]]
        %p330 = scmp.ne.s32.totalorder %s329, 0
        // Predicated region
        $region45: #{tpu_custom_call.1} parent=35 // pred_check
          %p331 = pneg %p330
        $region46: #{tpu_custom_call.1} parent=35 // pred_check_branch
          %333 = sbr.rel (%p331) target = $region48
        $region47: #{tpu_custom_call.1} parent=35 // pred_region
          %s334 = smul.u32 %s37, 512
          %s335 = sld [smem:[#allocation5 + %s38]]
          %s336 = sadd.s32 %s334, %s335
          %s337 = scalar_lea.vmem %s2, %s336
          %v338 = vld [vmem:[%s337] sm:$0xff]
          %v339 = vld [vmem:[%s337 + $0x8] sm:$0xff]
          %v340 = vld [vmem:[%s337 + $0x10] sm:$0xff]
          %v341 = vld [vmem:[%s337 + $0x18] sm:$0xff]
          %v342 = vld [vmem:[%s337 + $0x20] sm:$0xff]
          %v343 = vld [vmem:[%s337 + $0x28] sm:$0xff]
          %v344 = vld [vmem:[%s337 + $0x30] sm:$0xff]
          %v345 = vld [vmem:[%s337 + $0x38] sm:$0xff]
          %v346 = vld [vmem:[%s337 + $0x40] sm:$0xff]
          %v347 = vld [vmem:[%s337 + $0x48] sm:$0xff]
          %v348 = vld [vmem:[%s337 + $0x50] sm:$0xff]
          %v349 = vld [vmem:[%s337 + $0x58] sm:$0xff]
          %v350 = vld [vmem:[%s337 + $0x60] sm:$0xff]
          %v351 = vld [vmem:[%s337 + $0x68] sm:$0xff]
          %v352 = vld [vmem:[%s337 + $0x70] sm:$0xff]
          %v353 = vld [vmem:[%s337 + $0x78] sm:$0xff]
          %v354 = vld [vmem:[%s337 + $0x80] sm:$0xff]
          %v355 = vld [vmem:[%s337 + $0x88] sm:$0xff]
          %v356 = vld [vmem:[%s337 + $0x90] sm:$0xff]
          %v357 = vld [vmem:[%s337 + $0x98] sm:$0xff]
          %v358 = vld [vmem:[%s337 + $0xa0] sm:$0xff]
          %v359 = vld [vmem:[%s337 + $0xa8] sm:$0xff]
          %v360 = vld [vmem:[%s337 + $0xb0] sm:$0xff]
          %v361 = vld [vmem:[%s337 + $0xb8] sm:$0xff]
          %v362 = vld [vmem:[%s337 + $0xc0] sm:$0xff]
          %v363 = vld [vmem:[%s337 + $0xc8] sm:$0xff]
          %v364 = vld [vmem:[%s337 + $0xd0] sm:$0xff]
          %v365 = vld [vmem:[%s337 + $0xd8] sm:$0xff]
          %v366 = vld [vmem:[%s337 + $0xe0] sm:$0xff]
          %v367 = vld [vmem:[%s337 + $0xe8] sm:$0xff]
          %v368 = vld [vmem:[%s337 + $0xf0] sm:$0xff]
          %v369 = vld [vmem:[%s337 + $0xf8] sm:$0xff]
          %v370 = vld [vmem:[%s337 + $0x100] sm:$0xff]
          %v371 = vld [vmem:[%s337 + $0x108] sm:$0xff]
          %v372 = vld [vmem:[%s337 + $0x110] sm:$0xff]
          %v373 = vld [vmem:[%s337 + $0x118] sm:$0xff]
          %v374 = vld [vmem:[%s337 + $0x120] sm:$0xff]
          %v375 = vld [vmem:[%s337 + $0x128] sm:$0xff]
          %v376 = vld [vmem:[%s337 + $0x130] sm:$0xff]
          %v377 = vld [vmem:[%s337 + $0x138] sm:$0xff]
          %v378 = vld [vmem:[%s337 + $0x140] sm:$0xff]
          %v379 = vld [vmem:[%s337 + $0x148] sm:$0xff]
          %v380 = vld [vmem:[%s337 + $0x150] sm:$0xff]
          %v381 = vld [vmem:[%s337 + $0x158] sm:$0xff]
          %v382 = vld [vmem:[%s337 + $0x160] sm:$0xff]
          %v383 = vld [vmem:[%s337 + $0x168] sm:$0xff]
          %v384 = vld [vmem:[%s337 + $0x170] sm:$0xff]
          %v385 = vld [vmem:[%s337 + $0x178] sm:$0xff]
          %v386 = vld [vmem:[%s337 + $0x180] sm:$0xff]
          %v387 = vld [vmem:[%s337 + $0x188] sm:$0xff]
          %v388 = vld [vmem:[%s337 + $0x190] sm:$0xff]
          %v389 = vld [vmem:[%s337 + $0x198] sm:$0xff]
          %v390 = vld [vmem:[%s337 + $0x1a0] sm:$0xff]
          %v391 = vld [vmem:[%s337 + $0x1a8] sm:$0xff]
          %v392 = vld [vmem:[%s337 + $0x1b0] sm:$0xff]
          %v393 = vld [vmem:[%s337 + $0x1b8] sm:$0xff]
          %v394 = vld [vmem:[%s337 + $0x1c0] sm:$0xff]
          %v395 = vld [vmem:[%s337 + $0x1c8] sm:$0xff]
          %v396 = vld [vmem:[%s337 + $0x1d0] sm:$0xff]
          %v397 = vld [vmem:[%s337 + $0x1d8] sm:$0xff]
          %v398 = vld [vmem:[%s337 + $0x1e0] sm:$0xff]
          %v399 = vld [vmem:[%s337 + $0x1e8] sm:$0xff]
          %v400 = vld [vmem:[%s337 + $0x1f0] sm:$0xff]
          %v401 = vld [vmem:[%s337 + $0x1f8] sm:$0xff]
          %v402 = vpack.c.bf16 %v339, %v338
          %v403 = vpack.c.bf16 %v341, %v340
          %v404 = vpack.c.bf16 %v343, %v342
          %v405 = vpack.c.bf16 %v345, %v344
          %v406 = vpack.c.bf16 %v347, %v346
          %v407 = vpack.c.bf16 %v349, %v348
          %v408 = vpack.c.bf16 %v351, %v350
          %v409 = vpack.c.bf16 %v353, %v352
          %v410 = vpack.c.bf16 %v355, %v354
          %v411 = vpack.c.bf16 %v357, %v356
          %v412 = vpack.c.bf16 %v359, %v358
          %v413 = vpack.c.bf16 %v361, %v360
          %v414 = vpack.c.bf16 %v363, %v362
          %v415 = vpack.c.bf16 %v365, %v364
          %v416 = vpack.c.bf16 %v367, %v366
          %v417 = vpack.c.bf16 %v369, %v368
          %v418 = vpack.c.bf16 %v371, %v370
          %v419 = vpack.c.bf16 %v373, %v372
          %v420 = vpack.c.bf16 %v375, %v374
          %v421 = vpack.c.bf16 %v377, %v376
          %v422 = vpack.c.bf16 %v379, %v378
          %v423 = vpack.c.bf16 %v381, %v380
          %v424 = vpack.c.bf16 %v383, %v382
          %v425 = vpack.c.bf16 %v385, %v384
          %v426 = vpack.c.bf16 %v387, %v386
          %v427 = vpack.c.bf16 %v389, %v388
          %v428 = vpack.c.bf16 %v391, %v390
          %v429 = vpack.c.bf16 %v393, %v392
          %v430 = vpack.c.bf16 %v395, %v394
          %v431 = vpack.c.bf16 %v397, %v396
          %v432 = vpack.c.bf16 %v399, %v398
          %v433 = vpack.c.bf16 %v401, %v400
          %v434 = vld [vmem:[#allocation2] sm:$0xff]
          %v435 = vld [vmem:[#allocation2 + $0x8] sm:$0xff]
          %v436 = vld [vmem:[#allocation2 + $0x10] sm:$0xff]
          %v437 = vld [vmem:[#allocation2 + $0x18] sm:$0xff]
          %v438 = vld [vmem:[#allocation2 + $0x20] sm:$0xff]
          %v439 = vld [vmem:[#allocation2 + $0x28] sm:$0xff]
          %v440 = vld [vmem:[#allocation2 + $0x30] sm:$0xff]
          %v441 = vld [vmem:[#allocation2 + $0x38] sm:$0xff]
          %v442 = vld [vmem:[#allocation2 + $0x40] sm:$0xff]
          %v443 = vld [vmem:[#allocation2 + $0x48] sm:$0xff]
          %v444 = vld [vmem:[#allocation2 + $0x50] sm:$0xff]
          %v445 = vld [vmem:[#allocation2 + $0x58] sm:$0xff]
          %v446 = vld [vmem:[#allocation2 + $0x60] sm:$0xff]
          %v447 = vld [vmem:[#allocation2 + $0x68] sm:$0xff]
          %v448 = vld [vmem:[#allocation2 + $0x70] sm:$0xff]
          %v449 = vld [vmem:[#allocation2 + $0x78] sm:$0xff]
          %v450 = vld [vmem:[#allocation2 + $0x80] sm:$0xff]
          %v451 = vld [vmem:[#allocation2 + $0x88] sm:$0xff]
          %v452 = vld [vmem:[#allocation2 + $0x90] sm:$0xff]
          %v453 = vld [vmem:[#allocation2 + $0x98] sm:$0xff]
          %v454 = vld [vmem:[#allocation2 + $0xa0] sm:$0xff]
          %v455 = vld [vmem:[#allocation2 + $0xa8] sm:$0xff]
          %v456 = vld [vmem:[#allocation2 + $0xb0] sm:$0xff]
          %v457 = vld [vmem:[#allocation2 + $0xb8] sm:$0xff]
          %v458 = vld [vmem:[#allocation2 + $0xc0] sm:$0xff]
          %v459 = vld [vmem:[#allocation2 + $0xc8] sm:$0xff]
          %v460 = vld [vmem:[#allocation2 + $0xd0] sm:$0xff]
          %v461 = vld [vmem:[#allocation2 + $0xd8] sm:$0xff]
          %v462 = vld [vmem:[#allocation2 + $0xe0] sm:$0xff]
          %v463 = vld [vmem:[#allocation2 + $0xe8] sm:$0xff]
          %v464 = vld [vmem:[#allocation2 + $0xf0] sm:$0xff]
          %v465 = vld [vmem:[#allocation2 + $0xf8] sm:$0xff]
          %v466 = vld [vmem:[#allocation2 + $0x100] sm:$0xff]
          %v467 = vld [vmem:[#allocation2 + $0x108] sm:$0xff]
          %v468 = vld [vmem:[#allocation2 + $0x110] sm:$0xff]
          %v469 = vld [vmem:[#allocation2 + $0x118] sm:$0xff]
          %v470 = vld [vmem:[#allocation2 + $0x120] sm:$0xff]
          %v471 = vld [vmem:[#allocation2 + $0x128] sm:$0xff]
          %v472 = vld [vmem:[#allocation2 + $0x130] sm:$0xff]
          %v473 = vld [vmem:[#allocation2 + $0x138] sm:$0xff]
          %v474 = vld [vmem:[#allocation2 + $0x140] sm:$0xff]
          %v475 = vld [vmem:[#allocation2 + $0x148] sm:$0xff]
          %v476 = vld [vmem:[#allocation2 + $0x150] sm:$0xff]
          %v477 = vld [vmem:[#allocation2 + $0x158] sm:$0xff]
          %v478 = vld [vmem:[#allocation2 + $0x160] sm:$0xff]
          %v479 = vld [vmem:[#allocation2 + $0x168] sm:$0xff]
          %v480 = vld [vmem:[#allocation2 + $0x170] sm:$0xff]
          %v481 = vld [vmem:[#allocation2 + $0x178] sm:$0xff]
          %v482 = vld [vmem:[#allocation2 + $0x180] sm:$0xff]
          %v483 = vld [vmem:[#allocation2 + $0x188] sm:$0xff]
          %v484 = vld [vmem:[#allocation2 + $0x190] sm:$0xff]
          %v485 = vld [vmem:[#allocation2 + $0x198] sm:$0xff]
          %v486 = vld [vmem:[#allocation2 + $0x1a0] sm:$0xff]
          %v487 = vld [vmem:[#allocation2 + $0x1a8] sm:$0xff]
          %v488 = vld [vmem:[#allocation2 + $0x1b0] sm:$0xff]
          %v489 = vld [vmem:[#allocation2 + $0x1b8] sm:$0xff]
          %v490 = vld [vmem:[#allocation2 + $0x1c0] sm:$0xff]
          %v491 = vld [vmem:[#allocation2 + $0x1c8] sm:$0xff]
          %v492 = vld [vmem:[#allocation2 + $0x1d0] sm:$0xff]
          %v493 = vld [vmem:[#allocation2 + $0x1d8] sm:$0xff]
          %v494 = vld [vmem:[#allocation2 + $0x1e0] sm:$0xff]
          %v495 = vld [vmem:[#allocation2 + $0x1e8] sm:$0xff]
          %v496 = vld [vmem:[#allocation2 + $0x1f0] sm:$0xff]
          %v497 = vld [vmem:[#allocation2 + $0x1f8] sm:$0xff]
          %v498 = vld [vmem:[%s256] sm:$0x3]
          %vm499 = vcmask 31744
          %v501 = vsel %vm499, %v402, 0
          %v504 = vsel %vm499, %v403, 0
          %v507 = vsel %vm499, %v404, 0
          %v510 = vsel %vm499, %v405, 0
          %v513 = vsel %vm499, %v406, 0
          %v516 = vsel %vm499, %v407, 0
          %v519 = vsel %vm499, %v408, 0
          %v522 = vsel %vm499, %v409, 0
          %v525 = vsel %vm499, %v410, 0
          %v528 = vsel %vm499, %v411, 0
          %v531 = vsel %vm499, %v412, 0
          %v534 = vsel %vm499, %v413, 0
          %v537 = vsel %vm499, %v414, 0
          %v540 = vsel %vm499, %v415, 0
          %v543 = vsel %vm499, %v416, 0
          %v546 = vsel %vm499, %v417, 0
          %v549 = vsel %vm499, %v418, 0
          %v552 = vsel %vm499, %v419, 0
          %v555 = vsel %vm499, %v420, 0
          %v558 = vsel %vm499, %v421, 0
          %v561 = vsel %vm499, %v422, 0
          %v564 = vsel %vm499, %v423, 0
          %v567 = vsel %vm499, %v424, 0
          %v570 = vsel %vm499, %v425, 0
          %v573 = vsel %vm499, %v426, 0
          %v576 = vsel %vm499, %v427, 0
          %v579 = vsel %vm499, %v428, 0
          %v582 = vsel %vm499, %v429, 0
          %v585 = vsel %vm499, %v430, 0
          %v588 = vsel %vm499, %v431, 0
          %v591 = vsel %vm499, %v432, 0
          %v594 = vsel %vm499, %v433, 0
          %vm596 = vcmask 1041408
          %v598 = vsel %vm596, %v498, 0
          %600 = vmatprep.subr.bf16.mxu0 0
          %601 = vmatpush1.bf16.msra.mxu0 %v598
          %602 = vmatprep.subr.bf16.mxu0 0
          %603 = vmatpush1.bf16.msra.mxu0 0
          %604 = vmatprep.subr.bf16.mxu0 0
          %605 = vmatpush1.bf16.msra.mxu0 0
          %606 = vmatprep.subr.bf16.mxu0 0
          %607 = vmatpush1.bf16.msra.mxu0 0
          %608 = vmatprep.subr.bf16.mxu0 0
          %609 = vmatpush1.bf16.msra.mxu0 0
          %610 = vmatprep.subr.bf16.mxu0 0
          %611 = vmatpush1.bf16.msra.mxu0 0
          %612 = vmatprep.subr.bf16.mxu0 0
          %613 = vmatpush1.bf16.msra.mxu0 0
          %614 = vmatprep.subr.bf16.mxu0 0
          %615 = vmatpush1.bf16.msra.mxu0 0
          %616 = vmatprep.subr.bf16.mxu0 0
          %617 = vmatpush1.bf16.msra.mxu0 0
          %618 = vmatprep.subr.bf16.mxu0 0
          %619 = vmatpush1.bf16.msra.mxu0 0
          %620 = vmatprep.subr.bf16.mxu0 0
          %621 = vmatpush1.bf16.msra.mxu0 0
          %622 = vmatprep.subr.bf16.mxu0 0
          %623 = vmatpush1.bf16.msra.mxu0 0
          %624 = vmatprep.subr.bf16.mxu0 0
          %625 = vmatpush1.bf16.msra.mxu0 0
          %626 = vmatprep.subr.bf16.mxu0 0
          %627 = vmatpush1.bf16.msra.mxu0 0
          %628 = vmatprep.subr.bf16.mxu0 0
          %629 = vmatpush1.bf16.msra.mxu0 0
          %630 = vmatprep.subr.bf16.mxu0 0
          %631 = vmatpush1.bf16.msra.mxu0 0
          %632 = vmatprep.mubr.bf16.mxu0 0
          %633 = vmatmul.mubr.bf16.gmra.mrb[0].mxu0 %v501
          %v634 = vpop.f32.mrb[0].mxu0
          %v635 = vadd.f32 0.0, %v634
          %v636 = vpop.f32.mrb[0].mxu0
          %v637 = vpop.f32.mrb[0].mxu0
          %v638 = vadd.f32 0.0, %v637
          %v639 = vpop.f32.mrb[0].mxu0
          %640 = vmatprep.mubr.bf16.mxu0 0
          %641 = vmatmul.mubr.bf16.gmra.mrb[0].mxu0 %v504
          %v642 = vpop.f32.mrb[0].mxu0
          %v643 = vadd.f32 0.0, %v642
          %v644 = vpop.f32.mrb[0].mxu0
          %v645 = vpop.f32.mrb[0].mxu0
          %v646 = vadd.f32 0.0, %v645
          %v647 = vpop.f32.mrb[0].mxu0
          %648 = vmatprep.mubr.bf16.mxu0 0
          %649 = vmatmul.mubr.bf16.gmra.mrb[0].mxu0 %v507
          %v650 = vpop.f32.mrb[0].mxu0
          %v651 = vadd.f32 0.0, %v650
          %v652 = vpop.f32.mrb[0].mxu0
          %v653 = vpop.f32.mrb[0].mxu0
          %v654 = vadd.f32 0.0, %v653
          %v655 = vpop.f32.mrb[0].mxu0
          %656 = vmatprep.mubr.bf16.mxu0 0
          %657 = vmatmul.mubr.bf16.gmra.mrb[0].mxu0 %v510
          %v658 = vpop.f32.mrb[0].mxu0
          %v659 = vadd.f32 0.0, %v658
          %v660 = vpop.f32.mrb[0].mxu0
          %v661 = vpop.f32.mrb[0].mxu0
          %v662 = vadd.f32 0.0, %v661
          %v663 = vpop.f32.mrb[0].mxu0
          %664 = vmatprep.mubr.bf16.mxu0 0
          %665 = vmatmul.mubr.bf16.gmra.mrb[0].mxu0 %v513
          %v666 = vpop.f32.mrb[0].mxu0
          %v667 = vadd.f32 0.0, %v666
          %v668 = vpop.f32.mrb[0].mxu0
          %v669 = vpop.f32.mrb[0].mxu0
          %v670 = vadd.f32 0.0, %v669
          %v671 = vpop.f32.mrb[0].mxu0
          %672 = vmatprep.mubr.bf16.mxu0 0
          %673 = vmatmul.mubr.bf16.gmra.mrb[0].mxu0 %v516
          %v674 = vpop.f32.mrb[0].mxu0
          %v675 = vadd.f32 0.0, %v674
          %v676 = vpop.f32.mrb[0].mxu0
          %v677 = vpop.f32.mrb[0].mxu0
          %v678 = vadd.f32 0.0, %v677
          %v679 = vpop.f32.mrb[0].mxu0
          %680 = vmatprep.mubr.bf16.mxu0 0
          %681 = vmatmul.mubr.bf16.gmra.mrb[0].mxu0 %v519
          %v682 = vpop.f32.mrb[0].mxu0
          %v683 = vadd.f32 0.0, %v682
          %v684 = vpop.f32.mrb[0].mxu0
          %v685 = vpop.f32.mrb[0].mxu0
          %v686 = vadd.f32 0.0, %v685
          %v687 = vpop.f32.mrb[0].mxu0
          %688 = vmatprep.mubr.bf16.mxu0 0
          %689 = vmatmul.mubr.bf16.gmra.mrb[0].mxu0 %v522
          %v690 = vpop.f32.mrb[0].mxu0
          %v691 = vadd.f32 0.0, %v690
          %v692 = vpop.f32.mrb[0].mxu0
          %v693 = vpop.f32.mrb[0].mxu0
          %v694 = vadd.f32 0.0, %v693
          %v695 = vpop.f32.mrb[0].mxu0
          %696 = vmatprep.mubr.bf16.mxu0 0
          %697 = vmatmul.mubr.bf16.gmra.mrb[0].mxu0 %v525
          %v698 = vpop.f32.mrb[0].mxu0
          %v699 = vadd.f32 0.0, %v698
          %v700 = vpop.f32.mrb[0].mxu0
          %v701 = vpop.f32.mrb[0].mxu0
          %v702 = vadd.f32 0.0, %v701
          %v703 = vpop.f32.mrb[0].mxu0
          %704 = vmatprep.mubr.bf16.mxu0 0
          %705 = vmatmul.mubr.bf16.gmra.mrb[0].mxu0 %v528
          %v706 = vpop.f32.mrb[0].mxu0
          %v707 = vadd.f32 0.0, %v706
          %v708 = vpop.f32.mrb[0].mxu0
          %v709 = vpop.f32.mrb[0].mxu0
          %v710 = vadd.f32 0.0, %v709
          %v711 = vpop.f32.mrb[0].mxu0
          %712 = vmatprep.mubr.bf16.mxu0 0
          %713 = vmatmul.mubr.bf16.gmra.mrb[0].mxu0 %v531
          %v714 = vpop.f32.mrb[0].mxu0
          %v715 = vadd.f32 0.0, %v714
          %v716 = vpop.f32.mrb[0].mxu0
          %v717 = vpop.f32.mrb[0].mxu0
          %v718 = vadd.f32 0.0, %v717
          %v719 = vpop.f32.mrb[0].mxu0
          %720 = vmatprep.mubr.bf16.mxu0 0
          %721 = vmatmul.mubr.bf16.gmra.mrb[0].mxu0 %v534
          %v722 = vpop.f32.mrb[0].mxu0
          %v723 = vadd.f32 0.0, %v722
          %v724 = vpop.f32.mrb[0].mxu0
          %v725 = vpop.f32.mrb[0].mxu0
          %v726 = vadd.f32 0.0, %v725
          %v727 = vpop.f32.mrb[0].mxu0
          %728 = vmatprep.mubr.bf16.mxu0 0
          %729 = vmatmul.mubr.bf16.gmra.mrb[0].mxu0 %v537
          %v730 = vpop.f32.mrb[0].mxu0
          %v731 = vadd.f32 0.0, %v730
          %v732 = vpop.f32.mrb[0].mxu0
          %v733 = vpop.f32.mrb[0].mxu0
          %v734 = vadd.f32 0.0, %v733
          %v735 = vpop.f32.mrb[0].mxu0
          %736 = vmatprep.mubr.bf16.mxu0 0
          %737 = vmatmul.mubr.bf16.gmra.mrb[0].mxu0 %v540
          %v738 = vpop.f32.mrb[0].mxu0
          %v739 = vadd.f32 0.0, %v738
          %v740 = vpop.f32.mrb[0].mxu0
          %v741 = vpop.f32.mrb[0].mxu0
          %v742 = vadd.f32 0.0, %v741
          %v743 = vpop.f32.mrb[0].mxu0
          %744 = vmatprep.mubr.bf16.mxu0 0
          %745 = vmatmul.mubr.bf16.gmra.mrb[0].mxu0 %v543
          %v746 = vpop.f32.mrb[0].mxu0
          %v747 = vadd.f32 0.0, %v746
          %v748 = vpop.f32.mrb[0].mxu0
          %v749 = vpop.f32.mrb[0].mxu0
          %v750 = vadd.f32 0.0, %v749
          %v751 = vpop.f32.mrb[0].mxu0
          %752 = vmatprep.mubr.bf16.mxu0 0
          %753 = vmatmul.mubr.bf16.gmra.mrb[0].mxu0 %v546
          %v754 = vpop.f32.mrb[0].mxu0
          %v755 = vadd.f32 0.0, %v754
          %v756 = vpop.f32.mrb[0].mxu0
          %v757 = vpop.f32.mrb[0].mxu0
          %v758 = vadd.f32 0.0, %v757
          %v759 = vpop.f32.mrb[0].mxu0
          %760 = vmatprep.mubr.bf16.mxu0 0
          %761 = vmatmul.mubr.bf16.gmra.mrb[0].mxu0 %v549
          %v762 = vpop.f32.mrb[0].mxu0
          %v763 = vadd.f32 0.0, %v762
          %v764 = vpop.f32.mrb[0].mxu0
          %v765 = vpop.f32.mrb[0].mxu0
          %v766 = vadd.f32 0.0, %v765
          %v767 = vpop.f32.mrb[0].mxu0
          %768 = vmatprep.mubr.bf16.mxu0 0
          %769 = vmatmul.mubr.bf16.gmra.mrb[0].mxu0 %v552
          %v770 = vpop.f32.mrb[0].mxu0
          %v771 = vadd.f32 0.0, %v770
          %v772 = vpop.f32.mrb[0].mxu0
          %v773 = vpop.f32.mrb[0].mxu0
          %v774 = vadd.f32 0.0, %v773
          %v775 = vpop.f32.mrb[0].mxu0
          %776 = vmatprep.mubr.bf16.mxu0 0
          %777 = vmatmul.mubr.bf16.gmra.mrb[0].mxu0 %v555
          %v778 = vpop.f32.mrb[0].mxu0
          %v779 = vadd.f32 0.0, %v778
          %v780 = vpop.f32.mrb[0].mxu0
          %v781 = vpop.f32.mrb[0].mxu0
          %v782 = vadd.f32 0.0, %v781
          %v783 = vpop.f32.mrb[0].mxu0
          %784 = vmatprep.mubr.bf16.mxu0 0
          %785 = vmatmul.mubr.bf16.gmra.mrb[0].mxu0 %v558
          %v786 = vpop.f32.mrb[0].mxu0
          %v787 = vadd.f32 0.0, %v786
          %v788 = vpop.f32.mrb[0].mxu0
          %v789 = vpop.f32.mrb[0].mxu0
          %v790 = vadd.f32 0.0, %v789
          %v791 = vpop.f32.mrb[0].mxu0
          %792 = vmatprep.mubr.bf16.mxu0 0
          %793 = vmatmul.mubr.bf16.gmra.mrb[0].mxu0 %v561
          %v794 = vpop.f32.mrb[0].mxu0
          %v795 = vadd.f32 0.0, %v794
          %v796 = vpop.f32.mrb[0].mxu0
          %v797 = vpop.f32.mrb[0].mxu0
          %v798 = vadd.f32 0.0, %v797
          %v799 = vpop.f32.mrb[0].mxu0
          %800 = vmatprep.mubr.bf16.mxu0 0
          %801 = vmatmul.mubr.bf16.gmra.mrb[0].mxu0 %v564
          %v802 = vpop.f32.mrb[0].mxu0
          %v803 = vadd.f32 0.0, %v802
          %v804 = vpop.f32.mrb[0].mxu0
          %v805 = vpop.f32.mrb[0].mxu0
          %v806 = vadd.f32 0.0, %v805
          %v807 = vpop.f32.mrb[0].mxu0
          %808 = vmatprep.mubr.bf16.mxu0 0
          %809 = vmatmul.mubr.bf16.gmra.mrb[0].mxu0 %v567
          %v810 = vpop.f32.mrb[0].mxu0
          %v811 = vadd.f32 0.0, %v810
          %v812 = vpop.f32.mrb[0].mxu0
          %v813 = vpop.f32.mrb[0].mxu0
          %v814 = vadd.f32 0.0, %v813
          %v815 = vpop.f32.mrb[0].mxu0
          %816 = vmatprep.mubr.bf16.mxu0 0
          %817 = vmatmul.mubr.bf16.gmra.mrb[0].mxu0 %v570
          %v818 = vpop.f32.mrb[0].mxu0
          %v819 = vadd.f32 0.0, %v818
          %v820 = vpop.f32.mrb[0].mxu0
          %v821 = vpop.f32.mrb[0].mxu0
          %v822 = vadd.f32 0.0, %v821
          %v823 = vpop.f32.mrb[0].mxu0
          %824 = vmatprep.mubr.bf16.mxu0 0
          %825 = vmatmul.mubr.bf16.gmra.mrb[0].mxu0 %v573
          %v826 = vpop.f32.mrb[0].mxu0
          %v827 = vadd.f32 0.0, %v826
          %v828 = vpop.f32.mrb[0].mxu0
          %v829 = vpop.f32.mrb[0].mxu0
          %v830 = vadd.f32 0.0, %v829
          %v831 = vpop.f32.mrb[0].mxu0
          %832 = vmatprep.mubr.bf16.mxu0 0
          %833 = vmatmul.mubr.bf16.gmra.mrb[0].mxu0 %v576
          %v834 = vpop.f32.mrb[0].mxu0
          %v835 = vadd.f32 0.0, %v834
          %v836 = vpop.f32.mrb[0].mxu0
          %v837 = vpop.f32.mrb[0].mxu0
          %v838 = vadd.f32 0.0, %v837
          %v839 = vpop.f32.mrb[0].mxu0
          %840 = vmatprep.mubr.bf16.mxu0 0
          %841 = vmatmul.mubr.bf16.gmra.mrb[0].mxu0 %v579
          %v842 = vpop.f32.mrb[0].mxu0
          %v843 = vadd.f32 0.0, %v842
          %v844 = vpop.f32.mrb[0].mxu0
          %v845 = vpop.f32.mrb[0].mxu0
          %v846 = vadd.f32 0.0, %v845
          %v847 = vpop.f32.mrb[0].mxu0
          %848 = vmatprep.mubr.bf16.mxu0 0
          %849 = vmatmul.mubr.bf16.gmra.mrb[0].mxu0 %v582
          %v850 = vpop.f32.mrb[0].mxu0
          %v851 = vadd.f32 0.0, %v850
          %v852 = vpop.f32.mrb[0].mxu0
          %v853 = vpop.f32.mrb[0].mxu0
          %v854 = vadd.f32 0.0, %v853
          %v855 = vpop.f32.mrb[0].mxu0
          %856 = vmatprep.mubr.bf16.mxu0 0
          %857 = vmatmul.mubr.bf16.gmra.mrb[0].mxu0 %v585
          %v858 = vpop.f32.mrb[0].mxu0
          %v859 = vadd.f32 0.0, %v858
          %v860 = vpop.f32.mrb[0].mxu0
          %v861 = vpop.f32.mrb[0].mxu0
          %v862 = vadd.f32 0.0, %v861
          %v863 = vpop.f32.mrb[0].mxu0
          %864 = vmatprep.mubr.bf16.mxu0 0
          %865 = vmatmul.mubr.bf16.gmra.mrb[0].mxu0 %v588
          %v866 = vpop.f32.mrb[0].mxu0
          %v867 = vadd.f32 0.0, %v866
          %v868 = vpop.f32.mrb[0].mxu0
          %v869 = vpop.f32.mrb[0].mxu0
          %v870 = vadd.f32 0.0, %v869
          %v871 = vpop.f32.mrb[0].mxu0
          %872 = vmatprep.mubr.bf16.mxu0 0
          %873 = vmatmul.mubr.bf16.gmra.mrb[0].mxu0 %v591
          %v874 = vpop.f32.mrb[0].mxu0
          %v875 = vadd.f32 0.0, %v874
          %v876 = vpop.f32.mrb[0].mxu0
          %v877 = vpop.f32.mrb[0].mxu0
          %v878 = vadd.f32 0.0, %v877
          %v879 = vpop.f32.mrb[0].mxu0
          %880 = vmatprep.mubr.bf16.mxu0 0
          %881 = vmatmul.mubr.bf16.gmra.mrb[0].mxu0 %v594
          %v882 = vpop.f32.mrb[0].mxu0
          %v883 = vadd.f32 0.0, %v882
          %v884 = vpop.f32.mrb[0].mxu0
          %v885 = vpop.f32.mrb[0].mxu0
          %v886 = vadd.f32 0.0, %v885
          %v887 = vpop.f32.mrb[0].mxu0
          %888 = vdwg.mxu0
          %v889 = vadd.f32 %v434, %v635
          %v890 = vadd.f32 %v435, %v638
          %v891 = vadd.f32 %v436, %v643
          %v892 = vadd.f32 %v437, %v646
          %v893 = vadd.f32 %v438, %v651
          %v894 = vadd.f32 %v439, %v654
          %v895 = vadd.f32 %v440, %v659
          %v896 = vadd.f32 %v441, %v662
          %v897 = vadd.f32 %v442, %v667
          %v898 = vadd.f32 %v443, %v670
          %v899 = vadd.f32 %v444, %v675
          %v900 = vadd.f32 %v445, %v678
          %v901 = vadd.f32 %v446, %v683
          %v902 = vadd.f32 %v447, %v686
          %v903 = vadd.f32 %v448, %v691
          %v904 = vadd.f32 %v449, %v694
          %v905 = vadd.f32 %v450, %v699
          %v906 = vadd.f32 %v451, %v702
          %v907 = vadd.f32 %v452, %v707
          %v908 = vadd.f32 %v453, %v710
          %v909 = vadd.f32 %v454, %v715
          %v910 = vadd.f32 %v455, %v718
          %v911 = vadd.f32 %v456, %v723
          %v912 = vadd.f32 %v457, %v726
          %v913 = vadd.f32 %v458, %v731
          %v914 = vadd.f32 %v459, %v734
          %v915 = vadd.f32 %v460, %v739
          %v916 = vadd.f32 %v461, %v742
          %v917 = vadd.f32 %v462, %v747
          %v918 = vadd.f32 %v463, %v750
          %v919 = vadd.f32 %v464, %v755
          %v920 = vadd.f32 %v465, %v758
          %v921 = vadd.f32 %v466, %v763
          %v922 = vadd.f32 %v467, %v766
          %v923 = vadd.f32 %v468, %v771
          %v924 = vadd.f32 %v469, %v774
          %v925 = vadd.f32 %v470, %v779
          %v926 = vadd.f32 %v471, %v782
          %v927 = vadd.f32 %v472, %v787
          %v928 = vadd.f32 %v473, %v790
          %v929 = vadd.f32 %v474, %v795
          %v930 = vadd.f32 %v475, %v798
          %v931 = vadd.f32 %v476, %v803
          %v932 = vadd.f32 %v477, %v806
          %v933 = vadd.f32 %v478, %v811
          %v934 = vadd.f32 %v479, %v814
          %v935 = vadd.f32 %v480, %v819
          %v936 = vadd.f32 %v481, %v822
          %v937 = vadd.f32 %v482, %v827
          %v938 = vadd.f32 %v483, %v830
          %v939 = vadd.f32 %v484, %v835
          %v940 = vadd.f32 %v485, %v838
          %v941 = vadd.f32 %v486, %v843
          %v942 = vadd.f32 %v487, %v846
          %v943 = vadd.f32 %v488, %v851
          %v944 = vadd.f32 %v489, %v854
          %v945 = vadd.f32 %v490, %v859
          %v946 = vadd.f32 %v491, %v862
          %v947 = vadd.f32 %v492, %v867
          %v948 = vadd.f32 %v493, %v870
          %v949 = vadd.f32 %v494, %v875
          %v950 = vadd.f32 %v495, %v878
          %v951 = vadd.f32 %v496, %v883
          %v952 = vadd.f32 %v497, %v886
          %vm953 = vcmask 130048
          %954 = vst.msk [vmem:[#allocation2] sm:$0xff] %vm953, %v889
          %955 = vst.msk [vmem:[#allocation2 + $0x8] sm:$0xff] %vm953, %v890
          %956 = vst.msk [vmem:[#allocation2 + $0x10] sm:$0xff] %vm953, %v891
          %957 = vst.msk [vmem:[#allocation2 + $0x18] sm:$0xff] %vm953, %v892
          %958 = vst.msk [vmem:[#allocation2 + $0x20] sm:$0xff] %vm953, %v893
          %959 = vst.msk [vmem:[#allocation2 + $0x28] sm:$0xff] %vm953, %v894
          %960 = vst.msk [vmem:[#allocation2 + $0x30] sm:$0xff] %vm953, %v895
          %961 = vst.msk [vmem:[#allocation2 + $0x38] sm:$0xff] %vm953, %v896
          %962 = vst.msk [vmem:[#allocation2 + $0x40] sm:$0xff] %vm953, %v897
          %963 = vst.msk [vmem:[#allocation2 + $0x48] sm:$0xff] %vm953, %v898
          %964 = vst.msk [vmem:[#allocation2 + $0x50] sm:$0xff] %vm953, %v899
          %965 = vst.msk [vmem:[#allocation2 + $0x58] sm:$0xff] %vm953, %v900
          %966 = vst.msk [vmem:[#allocation2 + $0x60] sm:$0xff] %vm953, %v901
          %967 = vst.msk [vmem:[#allocation2 + $0x68] sm:$0xff] %vm953, %v902
          %968 = vst.msk [vmem:[#allocation2 + $0x70] sm:$0xff] %vm953, %v903
          %969 = vst.msk [vmem:[#allocation2 + $0x78] sm:$0xff] %vm953, %v904
          %970 = vst.msk [vmem:[#allocation2 + $0x80] sm:$0xff] %vm953, %v905
          %971 = vst.msk [vmem:[#allocation2 + $0x88] sm:$0xff] %vm953, %v906
          %972 = vst.msk [vmem:[#allocation2 + $0x90] sm:$0xff] %vm953, %v907
          %973 = vst.msk [vmem:[#allocation2 + $0x98] sm:$0xff] %vm953, %v908
          %974 = vst.msk [vmem:[#allocation2 + $0xa0] sm:$0xff] %vm953, %v909
          %975 = vst.msk [vmem:[#allocation2 + $0xa8] sm:$0xff] %vm953, %v910
          %976 = vst.msk [vmem:[#allocation2 + $0xb0] sm:$0xff] %vm953, %v911
          %977 = vst.msk [vmem:[#allocation2 + $0xb8] sm:$0xff] %vm953, %v912
          %978 = vst.msk [vmem:[#allocation2 + $0xc0] sm:$0xff] %vm953, %v913
          %979 = vst.msk [vmem:[#allocation2 + $0xc8] sm:$0xff] %vm953, %v914
          %980 = vst.msk [vmem:[#allocation2 + $0xd0] sm:$0xff] %vm953, %v915
          %981 = vst.msk [vmem:[#allocation2 + $0xd8] sm:$0xff] %vm953, %v916
          %982 = vst.msk [vmem:[#allocation2 + $0xe0] sm:$0xff] %vm953, %v917
          %983 = vst.msk [vmem:[#allocation2 + $0xe8] sm:$0xff] %vm953, %v918
          %984 = vst.msk [vmem:[#allocation2 + $0xf0] sm:$0xff] %vm953, %v919
          %985 = vst.msk [vmem:[#allocation2 + $0xf8] sm:$0xff] %vm953, %v920
          %986 = vst.msk [vmem:[#allocation2 + $0x100] sm:$0xff] %vm953, %v921
          %987 = vst.msk [vmem:[#allocation2 + $0x108] sm:$0xff] %vm953, %v922
          %988 = vst.msk [vmem:[#allocation2 + $0x110] sm:$0xff] %vm953, %v923
          %989 = vst.msk [vmem:[#allocation2 + $0x118] sm:$0xff] %vm953, %v924
          %990 = vst.msk [vmem:[#allocation2 + $0x120] sm:$0xff] %vm953, %v925
          %991 = vst.msk [vmem:[#allocation2 + $0x128] sm:$0xff] %vm953, %v926
          %992 = vst.msk [vmem:[#allocation2 + $0x130] sm:$0xff] %vm953, %v927
          %993 = vst.msk [vmem:[#allocation2 + $0x138] sm:$0xff] %vm953, %v928
          %994 = vst.msk [vmem:[#allocation2 + $0x140] sm:$0xff] %vm953, %v929
          %995 = vst.msk [vmem:[#allocation2 + $0x148] sm:$0xff] %vm953, %v930
          %996 = vst.msk [vmem:[#allocation2 + $0x150] sm:$0xff] %vm953, %v931
          %997 = vst.msk [vmem:[#allocation2 + $0x158] sm:$0xff] %vm953, %v932
          %998 = vst.msk [vmem:[#allocation2 + $0x160] sm:$0xff] %vm953, %v933
          %999 = vst.msk [vmem:[#allocation2 + $0x168] sm:$0xff] %vm953, %v934
          %1000 = vst.msk [vmem:[#allocation2 + $0x170] sm:$0xff] %vm953, %v935
          %1001 = vst.msk [vmem:[#allocation2 + $0x178] sm:$0xff] %vm953, %v936
          %1002 = vst.msk [vmem:[#allocation2 + $0x180] sm:$0xff] %vm953, %v937
          %1003 = vst.msk [vmem:[#allocation2 + $0x188] sm:$0xff] %vm953, %v938
          %1004 = vst.msk [vmem:[#allocation2 + $0x190] sm:$0xff] %vm953, %v939
          %1005 = vst.msk [vmem:[#allocation2 + $0x198] sm:$0xff] %vm953, %v940
          %1006 = vst.msk [vmem:[#allocation2 + $0x1a0] sm:$0xff] %vm953, %v941
          %1007 = vst.msk [vmem:[#allocation2 + $0x1a8] sm:$0xff] %vm953, %v942
          %1008 = vst.msk [vmem:[#allocation2 + $0x1b0] sm:$0xff] %vm953, %v943
          %1009 = vst.msk [vmem:[#allocation2 + $0x1b8] sm:$0xff] %vm953, %v944
          %1010 = vst.msk [vmem:[#allocation2 + $0x1c0] sm:$0xff] %vm953, %v945
          %1011 = vst.msk [vmem:[#allocation2 + $0x1c8] sm:$0xff] %vm953, %v946
          %1012 = vst.msk [vmem:[#allocation2 + $0x1d0] sm:$0xff] %vm953, %v947
          %1013 = vst.msk [vmem:[#allocation2 + $0x1d8] sm:$0xff] %vm953, %v948
          %1014 = vst.msk [vmem:[#allocation2 + $0x1e0] sm:$0xff] %vm953, %v949
          %1015 = vst.msk [vmem:[#allocation2 + $0x1e8] sm:$0xff] %vm953, %v950
          %1016 = vst.msk [vmem:[#allocation2 + $0x1f0] sm:$0xff] %vm953, %v951
          %1017 = vst.msk [vmem:[#allocation2 + $0x1f8] sm:$0xff] %vm953, %v952
        $region48: #{tpu_custom_call.1} parent=35 // pred_fallthru
          _
        %p1018 = scmp.eq.s32.totalorder %s38, 26
        // Predicated region
        $region49: #{tpu_custom_call.1} parent=35 // pred_check
          %p1019 = pneg %p1018
        $region50: #{tpu_custom_call.1} parent=35 // pred_check_branch
          %1021 = sbr.rel (%p1019) target = $region52
        $region51: #{tpu_custom_call.1} parent=35 // pred_region
          %v1022 = vld [vmem:[#allocation2] sm:$0xff]
          %v1023 = vld [vmem:[#allocation2 + $0x8] sm:$0xff]
          %v1024 = vld [vmem:[#allocation2 + $0x10] sm:$0xff]
          %v1025 = vld [vmem:[#allocation2 + $0x18] sm:$0xff]
          %v1026 = vld [vmem:[#allocation2 + $0x20] sm:$0xff]
          %v1027 = vld [vmem:[#allocation2 + $0x28] sm:$0xff]
          %v1028 = vld [vmem:[#allocation2 + $0x30] sm:$0xff]
          %v1029 = vld [vmem:[#allocation2 + $0x38] sm:$0xff]
          %v1030 = vld [vmem:[#allocation2 + $0x40] sm:$0xff]
          %v1031 = vld [vmem:[#allocation2 + $0x48] sm:$0xff]
          %v1032 = vld [vmem:[#allocation2 + $0x50] sm:$0xff]
          %v1033 = vld [vmem:[#allocation2 + $0x58] sm:$0xff]
          %v1034 = vld [vmem:[#allocation2 + $0x60] sm:$0xff]
          %v1035 = vld [vmem:[#allocation2 + $0x68] sm:$0xff]
          %v1036 = vld [vmem:[#allocation2 + $0x70] sm:$0xff]
          %v1037 = vld [vmem:[#allocation2 + $0x78] sm:$0xff]
          %v1038 = vld [vmem:[#allocation2 + $0x80] sm:$0xff]
          %v1039 = vld [vmem:[#allocation2 + $0x88] sm:$0xff]
          %v1040 = vld [vmem:[#allocation2 + $0x90] sm:$0xff]
          %v1041 = vld [vmem:[#allocation2 + $0x98] sm:$0xff]
          %v1042 = vld [vmem:[#allocation2 + $0xa0] sm:$0xff]
          %v1043 = vld [vmem:[#allocation2 + $0xa8] sm:$0xff]
          %v1044 = vld [vmem:[#allocation2 + $0xb0] sm:$0xff]
          %v1045 = vld [vmem:[#allocation2 + $0xb8] sm:$0xff]
          %v1046 = vld [vmem:[#allocation2 + $0xc0] sm:$0xff]
          %v1047 = vld [vmem:[#allocation2 + $0xc8] sm:$0xff]
          %v1048 = vld [vmem:[#allocation2 + $0xd0] sm:$0xff]
          %v1049 = vld [vmem:[#allocation2 + $0xd8] sm:$0xff]
          %v1050 = vld [vmem:[#allocation2 + $0xe0] sm:$0xff]
          %v1051 = vld [vmem:[#allocation2 + $0xe8] sm:$0xff]
          %v1052 = vld [vmem:[#allocation2 + $0xf0] sm:$0xff]
          %v1053 = vld [vmem:[#allocation2 + $0xf8] sm:$0xff]
          %v1054 = vld [vmem:[#allocation2 + $0x100] sm:$0xff]
          %v1055 = vld [vmem:[#allocation2 + $0x108] sm:$0xff]
          %v1056 = vld [vmem:[#allocation2 + $0x110] sm:$0xff]
          %v1057 = vld [vmem:[#allocation2 + $0x118] sm:$0xff]
          %v1058 = vld [vmem:[#allocation2 + $0x120] sm:$0xff]
          %v1059 = vld [vmem:[#allocation2 + $0x128] sm:$0xff]
          %v1060 = vld [vmem:[#allocation2 + $0x130] sm:$0xff]
          %v1061 = vld [vmem:[#allocation2 + $0x138] sm:$0xff]
          %v1062 = vld [vmem:[#allocation2 + $0x140] sm:$0xff]
          %v1063 = vld [vmem:[#allocation2 + $0x148] sm:$0xff]
          %v1064 = vld [vmem:[#allocation2 + $0x150] sm:$0xff]
          %v1065 = vld [vmem:[#allocation2 + $0x158] sm:$0xff]
          %v1066 = vld [vmem:[#allocation2 + $0x160] sm:$0xff]
          %v1067 = vld [vmem:[#allocation2 + $0x168] sm:$0xff]
          %v1068 = vld [vmem:[#allocation2 + $0x170] sm:$0xff]
          %v1069 = vld [vmem:[#allocation2 + $0x178] sm:$0xff]
          %v1070 = vld [vmem:[#allocation2 + $0x180] sm:$0xff]
          %v1071 = vld [vmem:[#allocation2 + $0x188] sm:$0xff]
          %v1072 = vld [vmem:[#allocation2 + $0x190] sm:$0xff]
          %v1073 = vld [vmem:[#allocation2 + $0x198] sm:$0xff]
          %v1074 = vld [vmem:[#allocation2 + $0x1a0] sm:$0xff]
          %v1075 = vld [vmem:[#allocation2 + $0x1a8] sm:$0xff]
          %v1076 = vld [vmem:[#allocation2 + $0x1b0] sm:$0xff]
          %v1077 = vld [vmem:[#allocation2 + $0x1b8] sm:$0xff]
          %v1078 = vld [vmem:[#allocation2 + $0x1c0] sm:$0xff]
          %v1079 = vld [vmem:[#allocation2 + $0x1c8] sm:$0xff]
          %v1080 = vld [vmem:[#allocation2 + $0x1d0] sm:$0xff]
          %v1081 = vld [vmem:[#allocation2 + $0x1d8] sm:$0xff]
          %v1082 = vld [vmem:[#allocation2 + $0x1e0] sm:$0xff]
          %v1083 = vld [vmem:[#allocation2 + $0x1e8] sm:$0xff]
          %v1084 = vld [vmem:[#allocation2 + $0x1f0] sm:$0xff]
          %v1085 = vld [vmem:[#allocation2 + $0x1f8] sm:$0xff]
          %v1086 = vld [vmem:[%s4] sm:$0x1]
          %v1088 = vlaneseq
          %v1089 = vshrl.u32 %v1088, 7
          %v1090 = vsub.s32 0, %v1089
          %v1091 = vrot.slane %v1086, %v1090
          %v1093 = vadd.f32 %v1022, %v1091
          %v1094 = vadd.f32 %v1023, %v1091
          %v1095 = vadd.f32 %v1024, %v1091
          %v1096 = vadd.f32 %v1025, %v1091
          %v1097 = vadd.f32 %v1026, %v1091
          %v1098 = vadd.f32 %v1027, %v1091
          %v1099 = vadd.f32 %v1028, %v1091
          %v1100 = vadd.f32 %v1029, %v1091
          %v1101 = vadd.f32 %v1030, %v1091
          %v1102 = vadd.f32 %v1031, %v1091
          %v1103 = vadd.f32 %v1032, %v1091
          %v1104 = vadd.f32 %v1033, %v1091
          %v1105 = vadd.f32 %v1034, %v1091
          %v1106 = vadd.f32 %v1035, %v1091
          %v1107 = vadd.f32 %v1036, %v1091
          %v1108 = vadd.f32 %v1037, %v1091
          %v1109 = vadd.f32 %v1038, %v1091
          %v1110 = vadd.f32 %v1039, %v1091
          %v1111 = vadd.f32 %v1040, %v1091
          %v1112 = vadd.f32 %v1041, %v1091
          %v1113 = vadd.f32 %v1042, %v1091
          %v1114 = vadd.f32 %v1043, %v1091
          %v1115 = vadd.f32 %v1044, %v1091
          %v1116 = vadd.f32 %v1045, %v1091
          %v1117 = vadd.f32 %v1046, %v1091
          %v1118 = vadd.f32 %v1047, %v1091
          %v1119 = vadd.f32 %v1048, %v1091
          %v1120 = vadd.f32 %v1049, %v1091
          %v1121 = vadd.f32 %v1050, %v1091
          %v1122 = vadd.f32 %v1051, %v1091
          %v1123 = vadd.f32 %v1052, %v1091
          %v1124 = vadd.f32 %v1053, %v1091
          %v1125 = vadd.f32 %v1054, %v1091
          %v1126 = vadd.f32 %v1055, %v1091
          %v1127 = vadd.f32 %v1056, %v1091
          %v1128 = vadd.f32 %v1057, %v1091
          %v1129 = vadd.f32 %v1058, %v1091
          %v1130 = vadd.f32 %v1059, %v1091
          %v1131 = vadd.f32 %v1060, %v1091
          %v1132 = vadd.f32 %v1061, %v1091
          %v1133 = vadd.f32 %v1062, %v1091
          %v1134 = vadd.f32 %v1063, %v1091
          %v1135 = vadd.f32 %v1064, %v1091
          %v1136 = vadd.f32 %v1065, %v1091
          %v1137 = vadd.f32 %v1066, %v1091
          %v1138 = vadd.f32 %v1067, %v1091
          %v1139 = vadd.f32 %v1068, %v1091
          %v1140 = vadd.f32 %v1069, %v1091
          %v1141 = vadd.f32 %v1070, %v1091
          %v1142 = vadd.f32 %v1071, %v1091
          %v1143 = vadd.f32 %v1072, %v1091
          %v1144 = vadd.f32 %v1073, %v1091
          %v1145 = vadd.f32 %v1074, %v1091
          %v1146 = vadd.f32 %v1075, %v1091
          %v1147 = vadd.f32 %v1076, %v1091
          %v1148 = vadd.f32 %v1077, %v1091
          %v1149 = vadd.f32 %v1078, %v1091
          %v1150 = vadd.f32 %v1079, %v1091
          %v1151 = vadd.f32 %v1080, %v1091
          %v1152 = vadd.f32 %v1081, %v1091
          %v1153 = vadd.f32 %v1082, %v1091
          %v1154 = vadd.f32 %v1083, %v1091
          %v1155 = vadd.f32 %v1084, %v1091
          %v1156 = vadd.f32 %v1085, %v1091
          %v1157 = vmax.f32 %v1093, 0.0
          %v1158 = vmax.f32 %v1094, 0.0
          %v1159 = vmax.f32 %v1095, 0.0
          %v1160 = vmax.f32 %v1096, 0.0
          %v1161 = vmax.f32 %v1097, 0.0
          %v1162 = vmax.f32 %v1098, 0.0
          %v1163 = vmax.f32 %v1099, 0.0
          %v1164 = vmax.f32 %v1100, 0.0
          %v1165 = vmax.f32 %v1101, 0.0
          %v1166 = vmax.f32 %v1102, 0.0
          %v1167 = vmax.f32 %v1103, 0.0
          %v1168 = vmax.f32 %v1104, 0.0
          %v1169 = vmax.f32 %v1105, 0.0
          %v1170 = vmax.f32 %v1106, 0.0
          %v1171 = vmax.f32 %v1107, 0.0
          %v1172 = vmax.f32 %v1108, 0.0
          %v1173 = vmax.f32 %v1109, 0.0
          %v1174 = vmax.f32 %v1110, 0.0
          %v1175 = vmax.f32 %v1111, 0.0
          %v1176 = vmax.f32 %v1112, 0.0
          %v1177 = vmax.f32 %v1113, 0.0
          %v1178 = vmax.f32 %v1114, 0.0
          %v1179 = vmax.f32 %v1115, 0.0
          %v1180 = vmax.f32 %v1116, 0.0
          %v1181 = vmax.f32 %v1117, 0.0
          %v1182 = vmax.f32 %v1118, 0.0
          %v1183 = vmax.f32 %v1119, 0.0
          %v1184 = vmax.f32 %v1120, 0.0
          %v1185 = vmax.f32 %v1121, 0.0
          %v1186 = vmax.f32 %v1122, 0.0
          %v1187 = vmax.f32 %v1123, 0.0
          %v1188 = vmax.f32 %v1124, 0.0
          %v1189 = vmax.f32 %v1125, 0.0
          %v1190 = vmax.f32 %v1126, 0.0
          %v1191 = vmax.f32 %v1127, 0.0
          %v1192 = vmax.f32 %v1128, 0.0
          %v1193 = vmax.f32 %v1129, 0.0
          %v1194 = vmax.f32 %v1130, 0.0
          %v1195 = vmax.f32 %v1131, 0.0
          %v1196 = vmax.f32 %v1132, 0.0
          %v1197 = vmax.f32 %v1133, 0.0
          %v1198 = vmax.f32 %v1134, 0.0
          %v1199 = vmax.f32 %v1135, 0.0
          %v1200 = vmax.f32 %v1136, 0.0
          %v1201 = vmax.f32 %v1137, 0.0
          %v1202 = vmax.f32 %v1138, 0.0
          %v1203 = vmax.f32 %v1139, 0.0
          %v1204 = vmax.f32 %v1140, 0.0
          %v1205 = vmax.f32 %v1141, 0.0
          %v1206 = vmax.f32 %v1142, 0.0
          %v1207 = vmax.f32 %v1143, 0.0
          %v1208 = vmax.f32 %v1144, 0.0
          %v1209 = vmax.f32 %v1145, 0.0
          %v1210 = vmax.f32 %v1146, 0.0
          %v1211 = vmax.f32 %v1147, 0.0
          %v1212 = vmax.f32 %v1148, 0.0
          %v1213 = vmax.f32 %v1149, 0.0
          %v1214 = vmax.f32 %v1150, 0.0
          %v1215 = vmax.f32 %v1151, 0.0
          %v1216 = vmax.f32 %v1152, 0.0
          %v1217 = vmax.f32 %v1153, 0.0
          %v1218 = vmax.f32 %v1154, 0.0
          %v1219 = vmax.f32 %v1155, 0.0
          %v1220 = vmax.f32 %v1156, 0.0
          %v1221 = vld [vmem:[%s224] sm:$0xff]
          %v1222 = vld [vmem:[%s224 + $0x8] sm:$0xff]
          %v1223 = vld [vmem:[%s224 + $0x10] sm:$0xff]
          %v1224 = vld [vmem:[%s224 + $0x18] sm:$0xff]
          %v1225 = vld [vmem:[%s224 + $0x20] sm:$0xff]
          %v1226 = vld [vmem:[%s224 + $0x28] sm:$0xff]
          %v1227 = vld [vmem:[%s224 + $0x30] sm:$0xff]
          %v1228 = vld [vmem:[%s224 + $0x38] sm:$0xff]
          %v1229 = vld [vmem:[%s224 + $0x40] sm:$0xff]
          %v1230 = vld [vmem:[%s224 + $0x48] sm:$0xff]
          %v1231 = vld [vmem:[%s224 + $0x50] sm:$0xff]
          %v1232 = vld [vmem:[%s224 + $0x58] sm:$0xff]
          %v1233 = vld [vmem:[%s224 + $0x60] sm:$0xff]
          %v1234 = vld [vmem:[%s224 + $0x68] sm:$0xff]
          %v1235 = vld [vmem:[%s224 + $0x70] sm:$0xff]
          %v1236 = vld [vmem:[%s224 + $0x78] sm:$0xff]
          %v1237 = vld [vmem:[%s224 + $0x80] sm:$0xff]
          %v1238 = vld [vmem:[%s224 + $0x88] sm:$0xff]
          %v1239 = vld [vmem:[%s224 + $0x90] sm:$0xff]
          %v1240 = vld [vmem:[%s224 + $0x98] sm:$0xff]
          %v1241 = vld [vmem:[%s224 + $0xa0] sm:$0xff]
          %v1242 = vld [vmem:[%s224 + $0xa8] sm:$0xff]
          %v1243 = vld [vmem:[%s224 + $0xb0] sm:$0xff]
          %v1244 = vld [vmem:[%s224 + $0xb8] sm:$0xff]
          %v1245 = vld [vmem:[%s224 + $0xc0] sm:$0xff]
          %v1246 = vld [vmem:[%s224 + $0xc8] sm:$0xff]
          %v1247 = vld [vmem:[%s224 + $0xd0] sm:$0xff]
          %v1248 = vld [vmem:[%s224 + $0xd8] sm:$0xff]
          %v1249 = vld [vmem:[%s224 + $0xe0] sm:$0xff]
          %v1250 = vld [vmem:[%s224 + $0xe8] sm:$0xff]
          %v1251 = vld [vmem:[%s224 + $0xf0] sm:$0xff]
          %v1252 = vld [vmem:[%s224 + $0xf8] sm:$0xff]
          %v1253 = vld [vmem:[%s224 + $0x100] sm:$0xff]
          %v1254 = vld [vmem:[%s224 + $0x108] sm:$0xff]
          %v1255 = vld [vmem:[%s224 + $0x110] sm:$0xff]
          %v1256 = vld [vmem:[%s224 + $0x118] sm:$0xff]
          %v1257 = vld [vmem:[%s224 + $0x120] sm:$0xff]
          %v1258 = vld [vmem:[%s224 + $0x128] sm:$0xff]
          %v1259 = vld [vmem:[%s224 + $0x130] sm:$0xff]
          %v1260 = vld [vmem:[%s224 + $0x138] sm:$0xff]
          %v1261 = vld [vmem:[%s224 + $0x140] sm:$0xff]
          %v1262 = vld [vmem:[%s224 + $0x148] sm:$0xff]
          %v1263 = vld [vmem:[%s224 + $0x150] sm:$0xff]
          %v1264 = vld [vmem:[%s224 + $0x158] sm:$0xff]
          %v1265 = vld [vmem:[%s224 + $0x160] sm:$0xff]
          %v1266 = vld [vmem:[%s224 + $0x168] sm:$0xff]
          %v1267 = vld [vmem:[%s224 + $0x170] sm:$0xff]
          %v1268 = vld [vmem:[%s224 + $0x178] sm:$0xff]
          %v1269 = vld [vmem:[%s224 + $0x180] sm:$0xff]
          %v1270 = vld [vmem:[%s224 + $0x188] sm:$0xff]
          %v1271 = vld [vmem:[%s224 + $0x190] sm:$0xff]
          %v1272 = vld [vmem:[%s224 + $0x198] sm:$0xff]
          %v1273 = vld [vmem:[%s224 + $0x1a0] sm:$0xff]
          %v1274 = vld [vmem:[%s224 + $0x1a8] sm:$0xff]
          %v1275 = vld [vmem:[%s224 + $0x1b0] sm:$0xff]
          %v1276 = vld [vmem:[%s224 + $0x1b8] sm:$0xff]
          %v1277 = vld [vmem:[%s224 + $0x1c0] sm:$0xff]
          %v1278 = vld [vmem:[%s224 + $0x1c8] sm:$0xff]
          %v1279 = vld [vmem:[%s224 + $0x1d0] sm:$0xff]
          %v1280 = vld [vmem:[%s224 + $0x1d8] sm:$0xff]
          %v1281 = vld [vmem:[%s224 + $0x1e0] sm:$0xff]
          %v1282 = vld [vmem:[%s224 + $0x1e8] sm:$0xff]
          %v1283 = vld [vmem:[%s224 + $0x1f0] sm:$0xff]
          %v1284 = vld [vmem:[%s224 + $0x1f8] sm:$0xff]
          %1286 = vset.pattern.permute.xlu0 0
          %1287 = vperm.xlu0 %1286, %v1221
          %v1288 = vpop.permute.xlu0 %1287
          %1291 = vset.pattern.permute.xlu0 0
          %1292 = vperm.xlu0 %1291, %v1222
          %v1293 = vpop.permute.xlu0 %1292
          %1296 = vset.pattern.permute.xlu0 0
          %1297 = vperm.xlu0 %1296, %v1223
          %v1298 = vpop.permute.xlu0 %1297
          %1301 = vset.pattern.permute.xlu0 0
          %1302 = vperm.xlu0 %1301, %v1224
          %v1303 = vpop.permute.xlu0 %1302
          %1306 = vset.pattern.permute.xlu0 0
          %1307 = vperm.xlu0 %1306, %v1225
          %v1308 = vpop.permute.xlu0 %1307
          %1311 = vset.pattern.permute.xlu0 0
          %1312 = vperm.xlu0 %1311, %v1226
          %v1313 = vpop.permute.xlu0 %1312
          %1316 = vset.pattern.permute.xlu0 0
          %1317 = vperm.xlu0 %1316, %v1227
          %v1318 = vpop.permute.xlu0 %1317
          %1321 = vset.pattern.permute.xlu0 0
          %1322 = vperm.xlu0 %1321, %v1228
          %v1323 = vpop.permute.xlu0 %1322
          %1326 = vset.pattern.permute.xlu0 0
          %1327 = vperm.xlu0 %1326, %v1229
          %v1328 = vpop.permute.xlu0 %1327
          %1331 = vset.pattern.permute.xlu0 0
          %1332 = vperm.xlu0 %1331, %v1230
          %v1333 = vpop.permute.xlu0 %1332
          %1336 = vset.pattern.permute.xlu0 0
          %1337 = vperm.xlu0 %1336, %v1231
          %v1338 = vpop.permute.xlu0 %1337
          %1341 = vset.pattern.permute.xlu0 0
          %1342 = vperm.xlu0 %1341, %v1232
          %v1343 = vpop.permute.xlu0 %1342
          %1346 = vset.pattern.permute.xlu0 0
          %1347 = vperm.xlu0 %1346, %v1233
          %v1348 = vpop.permute.xlu0 %1347
          %1351 = vset.pattern.permute.xlu0 0
          %1352 = vperm.xlu0 %1351, %v1234
          %v1353 = vpop.permute.xlu0 %1352
          %1356 = vset.pattern.permute.xlu0 0
          %1357 = vperm.xlu0 %1356, %v1235
          %v1358 = vpop.permute.xlu0 %1357
          %1361 = vset.pattern.permute.xlu0 0
          %1362 = vperm.xlu0 %1361, %v1236
          %v1363 = vpop.permute.xlu0 %1362
          %1366 = vset.pattern.permute.xlu0 0
          %1367 = vperm.xlu0 %1366, %v1237
          %v1368 = vpop.permute.xlu0 %1367
          %1371 = vset.pattern.permute.xlu0 0
          %1372 = vperm.xlu0 %1371, %v1238
          %v1373 = vpop.permute.xlu0 %1372
          %1376 = vset.pattern.permute.xlu0 0
          %1377 = vperm.xlu0 %1376, %v1239
          %v1378 = vpop.permute.xlu0 %1377
          %1381 = vset.pattern.permute.xlu0 0
          %1382 = vperm.xlu0 %1381, %v1240
          %v1383 = vpop.permute.xlu0 %1382
          %1386 = vset.pattern.permute.xlu0 0
          %1387 = vperm.xlu0 %1386, %v1241
          %v1388 = vpop.permute.xlu0 %1387
          %1391 = vset.pattern.permute.xlu0 0
          %1392 = vperm.xlu0 %1391, %v1242
          %v1393 = vpop.permute.xlu0 %1392
          %1396 = vset.pattern.permute.xlu0 0
          %1397 = vperm.xlu0 %1396, %v1243
          %v1398 = vpop.permute.xlu0 %1397
          %1401 = vset.pattern.permute.xlu0 0
          %1402 = vperm.xlu0 %1401, %v1244
          %v1403 = vpop.permute.xlu0 %1402
          %1406 = vset.pattern.permute.xlu0 0
          %1407 = vperm.xlu0 %1406, %v1245
          %v1408 = vpop.permute.xlu0 %1407
          %1411 = vset.pattern.permute.xlu0 0
          %1412 = vperm.xlu0 %1411, %v1246
          %v1413 = vpop.permute.xlu0 %1412
          %1416 = vset.pattern.permute.xlu0 0
          %1417 = vperm.xlu0 %1416, %v1247
          %v1418 = vpop.permute.xlu0 %1417
          %1421 = vset.pattern.permute.xlu0 0
          %1422 = vperm.xlu0 %1421, %v1248
          %v1423 = vpop.permute.xlu0 %1422
          %1426 = vset.pattern.permute.xlu0 0
          %1427 = vperm.xlu0 %1426, %v1249
          %v1428 = vpop.permute.xlu0 %1427
          %1431 = vset.pattern.permute.xlu0 0
          %1432 = vperm.xlu0 %1431, %v1250
          %v1433 = vpop.permute.xlu0 %1432
          %1436 = vset.pattern.permute.xlu0 0
          %1437 = vperm.xlu0 %1436, %v1251
          %v1438 = vpop.permute.xlu0 %1437
          %1441 = vset.pattern.permute.xlu0 0
          %1442 = vperm.xlu0 %1441, %v1252
          %v1443 = vpop.permute.xlu0 %1442
          %1446 = vset.pattern.permute.xlu0 0
          %1447 = vperm.xlu0 %1446, %v1253
          %v1448 = vpop.permute.xlu0 %1447
          %1451 = vset.pattern.permute.xlu0 0
          %1452 = vperm.xlu0 %1451, %v1254
          %v1453 = vpop.permute.xlu0 %1452
          %1456 = vset.pattern.permute.xlu0 0
          %1457 = vperm.xlu0 %1456, %v1255
          %v1458 = vpop.permute.xlu0 %1457
          %1461 = vset.pattern.permute.xlu0 0
          %1462 = vperm.xlu0 %1461, %v1256
          %v1463 = vpop.permute.xlu0 %1462
          %1466 = vset.pattern.permute.xlu0 0
          %1467 = vperm.xlu0 %1466, %v1257
          %v1468 = vpop.permute.xlu0 %1467
          %1471 = vset.pattern.permute.xlu0 0
          %1472 = vperm.xlu0 %1471, %v1258
          %v1473 = vpop.permute.xlu0 %1472
          %1476 = vset.pattern.permute.xlu0 0
          %1477 = vperm.xlu0 %1476, %v1259
          %v1478 = vpop.permute.xlu0 %1477
          %1481 = vset.pattern.permute.xlu0 0
          %1482 = vperm.xlu0 %1481, %v1260
          %v1483 = vpop.permute.xlu0 %1482
          %1486 = vset.pattern.permute.xlu0 0
          %1487 = vperm.xlu0 %1486, %v1261
          %v1488 = vpop.permute.xlu0 %1487
          %1491 = vset.pattern.permute.xlu0 0
          %1492 = vperm.xlu0 %1491, %v1262
          %v1493 = vpop.permute.xlu0 %1492
          %1496 = vset.pattern.permute.xlu0 0
          %1497 = vperm.xlu0 %1496, %v1263
          %v1498 = vpop.permute.xlu0 %1497
          %1501 = vset.pattern.permute.xlu0 0
          %1502 = vperm.xlu0 %1501, %v1264
          %v1503 = vpop.permute.xlu0 %1502
          %1506 = vset.pattern.permute.xlu0 0
          %1507 = vperm.xlu0 %1506, %v1265
          %v1508 = vpop.permute.xlu0 %1507
          %1511 = vset.pattern.permute.xlu0 0
          %1512 = vperm.xlu0 %1511, %v1266
          %v1513 = vpop.permute.xlu0 %1512
          %1516 = vset.pattern.permute.xlu0 0
          %1517 = vperm.xlu0 %1516, %v1267
          %v1518 = vpop.permute.xlu0 %1517
          %1521 = vset.pattern.permute.xlu0 0
          %1522 = vperm.xlu0 %1521, %v1268
          %v1523 = vpop.permute.xlu0 %1522
          %1526 = vset.pattern.permute.xlu0 0
          %1527 = vperm.xlu0 %1526, %v1269
          %v1528 = vpop.permute.xlu0 %1527
          %1531 = vset.pattern.permute.xlu0 0
          %1532 = vperm.xlu0 %1531, %v1270
          %v1533 = vpop.permute.xlu0 %1532
          %1536 = vset.pattern.permute.xlu0 0
          %1537 = vperm.xlu0 %1536, %v1271
          %v1538 = vpop.permute.xlu0 %1537
          %1541 = vset.pattern.permute.xlu0 0
          %1542 = vperm.xlu0 %1541, %v1272
          %v1543 = vpop.permute.xlu0 %1542
          %1546 = vset.pattern.permute.xlu0 0
          %1547 = vperm.xlu0 %1546, %v1273
          %v1548 = vpop.permute.xlu0 %1547
          %1551 = vset.pattern.permute.xlu0 0
          %1552 = vperm.xlu0 %1551, %v1274
          %v1553 = vpop.permute.xlu0 %1552
          %1556 = vset.pattern.permute.xlu0 0
          %1557 = vperm.xlu0 %1556, %v1275
          %v1558 = vpop.permute.xlu0 %1557
          %1561 = vset.pattern.permute.xlu0 0
          %1562 = vperm.xlu0 %1561, %v1276
          %v1563 = vpop.permute.xlu0 %1562
          %1566 = vset.pattern.permute.xlu0 0
          %1567 = vperm.xlu0 %1566, %v1277
          %v1568 = vpop.permute.xlu0 %1567
          %1571 = vset.pattern.permute.xlu0 0
          %1572 = vperm.xlu0 %1571, %v1278
          %v1573 = vpop.permute.xlu0 %1572
          %1576 = vset.pattern.permute.xlu0 0
          %1577 = vperm.xlu0 %1576, %v1279
          %v1578 = vpop.permute.xlu0 %1577
          %1581 = vset.pattern.permute.xlu0 0
          %1582 = vperm.xlu0 %1581, %v1280
          %v1583 = vpop.permute.xlu0 %1582
          %1586 = vset.pattern.permute.xlu0 0
          %1587 = vperm.xlu0 %1586, %v1281
          %v1588 = vpop.permute.xlu0 %1587
          %1591 = vset.pattern.permute.xlu0 0
          %1592 = vperm.xlu0 %1591, %v1282
          %v1593 = vpop.permute.xlu0 %1592
          %1596 = vset.pattern.permute.xlu0 0
          %1597 = vperm.xlu0 %1596, %v1283
          %v1598 = vpop.permute.xlu0 %1597
          %1601 = vset.pattern.permute.xlu0 0
          %1602 = vperm.xlu0 %1601, %v1284
          %v1603 = vpop.permute.xlu0 %1602
          %v1605 = vmul.f32 %v1157, %v1288
          %v1606 = vmul.f32 %v1158, %v1293
          %v1607 = vmul.f32 %v1159, %v1298
          %v1608 = vmul.f32 %v1160, %v1303
          %v1609 = vmul.f32 %v1161, %v1308
          %v1610 = vmul.f32 %v1162, %v1313
          %v1611 = vmul.f32 %v1163, %v1318
          %v1612 = vmul.f32 %v1164, %v1323
          %v1613 = vmul.f32 %v1165, %v1328
          %v1614 = vmul.f32 %v1166, %v1333
          %v1615 = vmul.f32 %v1167, %v1338
          %v1616 = vmul.f32 %v1168, %v1343
          %v1617 = vmul.f32 %v1169, %v1348
          %v1618 = vmul.f32 %v1170, %v1353
          %v1619 = vmul.f32 %v1171, %v1358
          %v1620 = vmul.f32 %v1172, %v1363
          %v1621 = vmul.f32 %v1173, %v1368
          %v1622 = vmul.f32 %v1174, %v1373
          %v1623 = vmul.f32 %v1175, %v1378
          %v1624 = vmul.f32 %v1176, %v1383
          %v1625 = vmul.f32 %v1177, %v1388
          %v1626 = vmul.f32 %v1178, %v1393
          %v1627 = vmul.f32 %v1179, %v1398
          %v1628 = vmul.f32 %v1180, %v1403
          %v1629 = vmul.f32 %v1181, %v1408
          %v1630 = vmul.f32 %v1182, %v1413
          %v1631 = vmul.f32 %v1183, %v1418
          %v1632 = vmul.f32 %v1184, %v1423
          %v1633 = vmul.f32 %v1185, %v1428
          %v1634 = vmul.f32 %v1186, %v1433
          %v1635 = vmul.f32 %v1187, %v1438
          %v1636 = vmul.f32 %v1188, %v1443
          %v1637 = vmul.f32 %v1189, %v1448
          %v1638 = vmul.f32 %v1190, %v1453
          %v1639 = vmul.f32 %v1191, %v1458
          %v1640 = vmul.f32 %v1192, %v1463
          %v1641 = vmul.f32 %v1193, %v1468
          %v1642 = vmul.f32 %v1194, %v1473
          %v1643 = vmul.f32 %v1195, %v1478
          %v1644 = vmul.f32 %v1196, %v1483
          %v1645 = vmul.f32 %v1197, %v1488
          %v1646 = vmul.f32 %v1198, %v1493
          %v1647 = vmul.f32 %v1199, %v1498
          %v1648 = vmul.f32 %v1200, %v1503
          %v1649 = vmul.f32 %v1201, %v1508
          %v1650 = vmul.f32 %v1202, %v1513
          %v1651 = vmul.f32 %v1203, %v1518
          %v1652 = vmul.f32 %v1204, %v1523
          %v1653 = vmul.f32 %v1205, %v1528
          %v1654 = vmul.f32 %v1206, %v1533
          %v1655 = vmul.f32 %v1207, %v1538
          %v1656 = vmul.f32 %v1208, %v1543
          %v1657 = vmul.f32 %v1209, %v1548
          %v1658 = vmul.f32 %v1210, %v1553
          %v1659 = vmul.f32 %v1211, %v1558
          %v1660 = vmul.f32 %v1212, %v1563
          %v1661 = vmul.f32 %v1213, %v1568
          %v1662 = vmul.f32 %v1214, %v1573
          %v1663 = vmul.f32 %v1215, %v1578
          %v1664 = vmul.f32 %v1216, %v1583
          %v1665 = vmul.f32 %v1217, %v1588
          %v1666 = vmul.f32 %v1218, %v1593
          %v1667 = vmul.f32 %v1219, %v1598
          %v1668 = vmul.f32 %v1220, %v1603
          %v1669 = vpack.c.bf16 %v1606, %v1605
          %v1670 = vpack.c.bf16 %v1608, %v1607
          %v1671 = vpack.c.bf16 %v1610, %v1609
          %v1672 = vpack.c.bf16 %v1612, %v1611
          %v1673 = vpack.c.bf16 %v1614, %v1613
          %v1674 = vpack.c.bf16 %v1616, %v1615
          %v1675 = vpack.c.bf16 %v1618, %v1617
          %v1676 = vpack.c.bf16 %v1620, %v1619
          %v1677 = vpack.c.bf16 %v1622, %v1621
          %v1678 = vpack.c.bf16 %v1624, %v1623
          %v1679 = vpack.c.bf16 %v1626, %v1625
          %v1680 = vpack.c.bf16 %v1628, %v1627
          %v1681 = vpack.c.bf16 %v1630, %v1629
          %v1682 = vpack.c.bf16 %v1632, %v1631
          %v1683 = vpack.c.bf16 %v1634, %v1633
          %v1684 = vpack.c.bf16 %v1636, %v1635
          %v1685 = vpack.c.bf16 %v1638, %v1637
          %v1686 = vpack.c.bf16 %v1640, %v1639
          %v1687 = vpack.c.bf16 %v1642, %v1641
          %v1688 = vpack.c.bf16 %v1644, %v1643
          %v1689 = vpack.c.bf16 %v1646, %v1645
          %v1690 = vpack.c.bf16 %v1648, %v1647
          %v1691 = vpack.c.bf16 %v1650, %v1649
          %v1692 = vpack.c.bf16 %v1652, %v1651
          %v1693 = vpack.c.bf16 %v1654, %v1653
          %v1694 = vpack.c.bf16 %v1656, %v1655
          %v1695 = vpack.c.bf16 %v1658, %v1657
          %v1696 = vpack.c.bf16 %v1660, %v1659
          %v1697 = vpack.c.bf16 %v1662, %v1661
          %v1698 = vpack.c.bf16 %v1664, %v1663
          %v1699 = vpack.c.bf16 %v1666, %v1665
          %v1700 = vpack.c.bf16 %v1668, %v1667
          %v1733 = vunpack.c.l.b16 %v1669
          %v1734 = vunpack.c.h.b16 %v1669
          %v1735 = vunpack.c.l.b16 %v1670
          %v1736 = vunpack.c.h.b16 %v1670
          %v1737 = vunpack.c.l.b16 %v1671
          %v1738 = vunpack.c.h.b16 %v1671
          %v1739 = vunpack.c.l.b16 %v1672
          %v1740 = vunpack.c.h.b16 %v1672
          %v1741 = vunpack.c.l.b16 %v1673
          %v1742 = vunpack.c.h.b16 %v1673
          %v1743 = vunpack.c.l.b16 %v1674
          %v1744 = vunpack.c.h.b16 %v1674
          %v1745 = vunpack.c.l.b16 %v1675
          %v1746 = vunpack.c.h.b16 %v1675
          %v1747 = vunpack.c.l.b16 %v1676
          %v1748 = vunpack.c.h.b16 %v1676
          %v1749 = vunpack.c.l.b16 %v1677
          %v1750 = vunpack.c.h.b16 %v1677
          %v1751 = vunpack.c.l.b16 %v1678
          %v1752 = vunpack.c.h.b16 %v1678
          %v1753 = vunpack.c.l.b16 %v1679
          %v1754 = vunpack.c.h.b16 %v1679
          %v1755 = vunpack.c.l.b16 %v1680
          %v1756 = vunpack.c.h.b16 %v1680
          %v1757 = vunpack.c.l.b16 %v1681
          %v1758 = vunpack.c.h.b16 %v1681
          %v1759 = vunpack.c.l.b16 %v1682
          %v1760 = vunpack.c.h.b16 %v1682
          %v1761 = vunpack.c.l.b16 %v1683
          %v1762 = vunpack.c.h.b16 %v1683
          %v1763 = vunpack.c.l.b16 %v1684
          %v1764 = vunpack.c.h.b16 %v1684
          %v1765 = vunpack.c.l.b16 %v1685
          %v1766 = vunpack.c.h.b16 %v1685
          %v1767 = vunpack.c.l.b16 %v1686
          %v1768 = vunpack.c.h.b16 %v1686
          %v1769 = vunpack.c.l.b16 %v1687
          %v1770 = vunpack.c.h.b16 %v1687
          %v1771 = vunpack.c.l.b16 %v1688
          %v1772 = vunpack.c.h.b16 %v1688
          %v1773 = vunpack.c.l.b16 %v1689
          %v1774 = vunpack.c.h.b16 %v1689
          %v1775 = vunpack.c.l.b16 %v1690
          %v1776 = vunpack.c.h.b16 %v1690
          %v1777 = vunpack.c.l.b16 %v1691
          %v1778 = vunpack.c.h.b16 %v1691
          %v1779 = vunpack.c.l.b16 %v1692
          %v1780 = vunpack.c.h.b16 %v1692
          %v1781 = vunpack.c.l.b16 %v1693
          %v1782 = vunpack.c.h.b16 %v1693
          %v1783 = vunpack.c.l.b16 %v1694
          %v1784 = vunpack.c.h.b16 %v1694
          %v1785 = vunpack.c.l.b16 %v1695
          %v1786 = vunpack.c.h.b16 %v1695
          %v1787 = vunpack.c.l.b16 %v1696
          %v1788 = vunpack.c.h.b16 %v1696
          %v1789 = vunpack.c.l.b16 %v1697
          %v1790 = vunpack.c.h.b16 %v1697
          %v1791 = vunpack.c.l.b16 %v1698
          %v1792 = vunpack.c.h.b16 %v1698
          %v1793 = vunpack.c.l.b16 %v1699
          %v1794 = vunpack.c.h.b16 %v1699
          %v1795 = vunpack.c.l.b16 %v1700
          %v1796 = vunpack.c.h.b16 %v1700
          %v1797 = vpack.c.b16 %v1733, %v1733
          %v1798 = vpack.c.b16 %v1734, %v1734
          %v1799 = vpack.c.b16 %v1735, %v1735
          %v1800 = vpack.c.b16 %v1736, %v1736
          %v1801 = vpack.c.b16 %v1737, %v1737
          %v1802 = vpack.c.b16 %v1738, %v1738
          %v1803 = vpack.c.b16 %v1739, %v1739
          %v1804 = vpack.c.b16 %v1740, %v1740
          %v1805 = vpack.c.b16 %v1741, %v1741
          %v1806 = vpack.c.b16 %v1742, %v1742
          %v1807 = vpack.c.b16 %v1743, %v1743
          %v1808 = vpack.c.b16 %v1744, %v1744
          %v1809 = vpack.c.b16 %v1745, %v1745
          %v1810 = vpack.c.b16 %v1746, %v1746
          %v1811 = vpack.c.b16 %v1747, %v1747
          %v1812 = vpack.c.b16 %v1748, %v1748
          %v1813 = vpack.c.b16 %v1749, %v1749
          %v1814 = vpack.c.b16 %v1750, %v1750
          %v1815 = vpack.c.b16 %v1751, %v1751
          %v1816 = vpack.c.b16 %v1752, %v1752
          %v1817 = vpack.c.b16 %v1753, %v1753
          %v1818 = vpack.c.b16 %v1754, %v1754
          %v1819 = vpack.c.b16 %v1755, %v1755
          %v1820 = vpack.c.b16 %v1756, %v1756
          %v1821 = vpack.c.b16 %v1757, %v1757
          %v1822 = vpack.c.b16 %v1758, %v1758
          %v1823 = vpack.c.b16 %v1759, %v1759
          %v1824 = vpack.c.b16 %v1760, %v1760
          %v1825 = vpack.c.b16 %v1761, %v1761
          %v1826 = vpack.c.b16 %v1762, %v1762
          %v1827 = vpack.c.b16 %v1763, %v1763
          %v1828 = vpack.c.b16 %v1764, %v1764
          %v1829 = vpack.c.b16 %v1765, %v1765
          %v1830 = vpack.c.b16 %v1766, %v1766
          %v1831 = vpack.c.b16 %v1767, %v1767
          %v1832 = vpack.c.b16 %v1768, %v1768
          %v1833 = vpack.c.b16 %v1769, %v1769
          %v1834 = vpack.c.b16 %v1770, %v1770
          %v1835 = vpack.c.b16 %v1771, %v1771
          %v1836 = vpack.c.b16 %v1772, %v1772
          %v1837 = vpack.c.b16 %v1773, %v1773
          %v1838 = vpack.c.b16 %v1774, %v1774
          %v1839 = vpack.c.b16 %v1775, %v1775
          %v1840 = vpack.c.b16 %v1776, %v1776
          %v1841 = vpack.c.b16 %v1777, %v1777
          %v1842 = vpack.c.b16 %v1778, %v1778
          %v1843 = vpack.c.b16 %v1779, %v1779
          %v1844 = vpack.c.b16 %v1780, %v1780
          %v1845 = vpack.c.b16 %v1781, %v1781
          %v1846 = vpack.c.b16 %v1782, %v1782
          %v1847 = vpack.c.b16 %v1783, %v1783
          %v1848 = vpack.c.b16 %v1784, %v1784
          %v1849 = vpack.c.b16 %v1785, %v1785
          %v1850 = vpack.c.b16 %v1786, %v1786
          %v1851 = vpack.c.b16 %v1787, %v1787
          %v1852 = vpack.c.b16 %v1788, %v1788
          %v1853 = vpack.c.b16 %v1789, %v1789
          %v1854 = vpack.c.b16 %v1790, %v1790
          %v1855 = vpack.c.b16 %v1791, %v1791
          %v1856 = vpack.c.b16 %v1792, %v1792
          %v1857 = vpack.c.b16 %v1793, %v1793
          %v1858 = vpack.c.b16 %v1794, %v1794
          %v1859 = vpack.c.b16 %v1795, %v1795
          %v1860 = vpack.c.b16 %v1796, %v1796
          %vm1925 = vcmask 125952
          %1926 = vst.msk [vmem:[%s252] sm:$0xf] %vm1925, %v1797
          %1927 = vst.msk [vmem:[%s252 + $0x4] sm:$0xf] %vm1925, %v1798
          %1928 = vst.msk [vmem:[%s252 + $0x8] sm:$0xf] %vm1925, %v1799
          %1929 = vst.msk [vmem:[%s252 + $0xc] sm:$0xf] %vm1925, %v1800
          %1930 = vst.msk [vmem:[%s252 + $0x10] sm:$0xf] %vm1925, %v1801
          %1931 = vst.msk [vmem:[%s252 + $0x14] sm:$0xf] %vm1925, %v1802
          %1932 = vst.msk [vmem:[%s252 + $0x18] sm:$0xf] %vm1925, %v1803
          %1933 = vst.msk [vmem:[%s252 + $0x1c] sm:$0xf] %vm1925, %v1804
          %1934 = vst.msk [vmem:[%s252 + $0x20] sm:$0xf] %vm1925, %v1805
          %1935 = vst.msk [vmem:[%s252 + $0x24] sm:$0xf] %vm1925, %v1806
          %1936 = vst.msk [vmem:[%s252 + $0x28] sm:$0xf] %vm1925, %v1807
          %1937 = vst.msk [vmem:[%s252 + $0x2c] sm:$0xf] %vm1925, %v1808
          %1938 = vst.msk [vmem:[%s252 + $0x30] sm:$0xf] %vm1925, %v1809
          %1939 = vst.msk [vmem:[%s252 + $0x34] sm:$0xf] %vm1925, %v1810
          %1940 = vst.msk [vmem:[%s252 + $0x38] sm:$0xf] %vm1925, %v1811
          %1941 = vst.msk [vmem:[%s252 + $0x3c] sm:$0xf] %vm1925, %v1812
          %1942 = vst.msk [vmem:[%s252 + $0x40] sm:$0xf] %vm1925, %v1813
          %1943 = vst.msk [vmem:[%s252 + $0x44] sm:$0xf] %vm1925, %v1814
          %1944 = vst.msk [vmem:[%s252 + $0x48] sm:$0xf] %vm1925, %v1815
          %1945 = vst.msk [vmem:[%s252 + $0x4c] sm:$0xf] %vm1925, %v1816
          %1946 = vst.msk [vmem:[%s252 + $0x50] sm:$0xf] %vm1925, %v1817
          %1947 = vst.msk [vmem:[%s252 + $0x54] sm:$0xf] %vm1925, %v1818
          %1948 = vst.msk [vmem:[%s252 + $0x58] sm:$0xf] %vm1925, %v1819
          %1949 = vst.msk [vmem:[%s252 + $0x5c] sm:$0xf] %vm1925, %v1820
          %1950 = vst.msk [vmem:[%s252 + $0x60] sm:$0xf] %vm1925, %v1821
          %1951 = vst.msk [vmem:[%s252 + $0x64] sm:$0xf] %vm1925, %v1822
          %1952 = vst.msk [vmem:[%s252 + $0x68] sm:$0xf] %vm1925, %v1823
          %1953 = vst.msk [vmem:[%s252 + $0x6c] sm:$0xf] %vm1925, %v1824
          %1954 = vst.msk [vmem:[%s252 + $0x70] sm:$0xf] %vm1925, %v1825
          %1955 = vst.msk [vmem:[%s252 + $0x74] sm:$0xf] %vm1925, %v1826
          %1956 = vst.msk [vmem:[%s252 + $0x78] sm:$0xf] %vm1925, %v1827
          %1957 = vst.msk [vmem:[%s252 + $0x7c] sm:$0xf] %vm1925, %v1828
          %1958 = vst.msk [vmem:[%s252 + $0x80] sm:$0xf] %vm1925, %v1829
          %1959 = vst.msk [vmem:[%s252 + $0x84] sm:$0xf] %vm1925, %v1830
          %1960 = vst.msk [vmem:[%s252 + $0x88] sm:$0xf] %vm1925, %v1831
          %1961 = vst.msk [vmem:[%s252 + $0x8c] sm:$0xf] %vm1925, %v1832
          %1962 = vst.msk [vmem:[%s252 + $0x90] sm:$0xf] %vm1925, %v1833
          %1963 = vst.msk [vmem:[%s252 + $0x94] sm:$0xf] %vm1925, %v1834
          %1964 = vst.msk [vmem:[%s252 + $0x98] sm:$0xf] %vm1925, %v1835
          %1965 = vst.msk [vmem:[%s252 + $0x9c] sm:$0xf] %vm1925, %v1836
          %1966 = vst.msk [vmem:[%s252 + $0xa0] sm:$0xf] %vm1925, %v1837
          %1967 = vst.msk [vmem:[%s252 + $0xa4] sm:$0xf] %vm1925, %v1838
          %1968 = vst.msk [vmem:[%s252 + $0xa8] sm:$0xf] %vm1925, %v1839
          %1969 = vst.msk [vmem:[%s252 + $0xac] sm:$0xf] %vm1925, %v1840
          %1970 = vst.msk [vmem:[%s252 + $0xb0] sm:$0xf] %vm1925, %v1841
          %1971 = vst.msk [vmem:[%s252 + $0xb4] sm:$0xf] %vm1925, %v1842
          %1972 = vst.msk [vmem:[%s252 + $0xb8] sm:$0xf] %vm1925, %v1843
          %1973 = vst.msk [vmem:[%s252 + $0xbc] sm:$0xf] %vm1925, %v1844
          %1974 = vst.msk [vmem:[%s252 + $0xc0] sm:$0xf] %vm1925, %v1845
          %1975 = vst.msk [vmem:[%s252 + $0xc4] sm:$0xf] %vm1925, %v1846
          %1976 = vst.msk [vmem:[%s252 + $0xc8] sm:$0xf] %vm1925, %v1847
          %1977 = vst.msk [vmem:[%s252 + $0xcc] sm:$0xf] %vm1925, %v1848
          %1978 = vst.msk [vmem:[%s252 + $0xd0] sm:$0xf] %vm1925, %v1849
          %1979 = vst.msk [vmem:[%s252 + $0xd4] sm:$0xf] %vm1925, %v1850
          %1980 = vst.msk [vmem:[%s252 + $0xd8] sm:$0xf] %vm1925, %v1851
          %1981 = vst.msk [vmem:[%s252 + $0xdc] sm:$0xf] %vm1925, %v1852
          %1982 = vst.msk [vmem:[%s252 + $0xe0] sm:$0xf] %vm1925, %v1853
          %1983 = vst.msk [vmem:[%s252 + $0xe4] sm:$0xf] %vm1925, %v1854
          %1984 = vst.msk [vmem:[%s252 + $0xe8] sm:$0xf] %vm1925, %v1855
          %1985 = vst.msk [vmem:[%s252 + $0xec] sm:$0xf] %vm1925, %v1856
          %1986 = vst.msk [vmem:[%s252 + $0xf0] sm:$0xf] %vm1925, %v1857
          %1987 = vst.msk [vmem:[%s252 + $0xf4] sm:$0xf] %vm1925, %v1858
          %1988 = vst.msk [vmem:[%s252 + $0xf8] sm:$0xf] %vm1925, %v1859
          %1989 = vst.msk [vmem:[%s252 + $0xfc] sm:$0xf] %vm1925, %v1860
        $region52: #{tpu_custom_call.1} parent=35 // pred_fallthru
          _
        %s1990 = sand.u32 %s147, 1
        %s1991 = scalar_lea.sflag [#allocation8], %s1990
        %s1992 = sand.u32 %s147, 1
        %s1993 = smul.addr %s1992, 256
        %s1994 = scalar_lea.vmem [#allocation9], %s1993
        // Predicated region
        $region53: #{tpu_custom_call.1} parent=35 // pred_check
          %p1995 = pneg %p157
        $region54: #{tpu_custom_call.1} parent=35 // pred_check_branch
          %1997 = sbr.rel (%p1995) target = $region56
        $region55: #{tpu_custom_call.1} parent=35 // pred_region
          %s1998 = smul.u32 64, %s37
          %s2000 = ssub.s32 4096, 4096
          %2001 = vsyncadd %s1991, %s2000
          %s2002 = smul.addr %s1998, 64
          %s2003 = scalar_lea.hbm %s6, %s2002
          %s2004 = sshll.u32 %s1994, 4
          %s2005 = int_to_ptr.vmem [resolvable:$true] %s2004
          %2010 = dma.vmem_to_hbm [thread:$0]  %s2005, 4096, %s2003, %s1991, 64, 64, 4
        $region56: #{tpu_custom_call.1} parent=35 // pred_fallthru
          _
      $region36: #{tpu_custom_call.1} parent=5 // pred_fallthru
        _
      %p2011 = scmp.le.s32.totalorder 2, %s28
      // Predicated region
      $region57: #{tpu_custom_call.1} parent=5 // pred_check
        %p2012 = pneg %p2011
      $region58: #{tpu_custom_call.1} parent=5 // pred_check_branch
        %2014 = sbr.rel (%p2012) target = $region60
      $region59: #{tpu_custom_call.1} parent=5 // pred_region
        %s2015 = ssub.s32 %s28, 2
        // Predicated region
        $region61: #{tpu_custom_call.1} parent=59 // pred_check
          %p2016 = pneg %p163
        $region62: #{tpu_custom_call.1} parent=59 // pred_check_branch
          %2018 = sbr.rel (%p2016) target = $region64
        $region63: #{tpu_custom_call.1} parent=59 // pred_region
          %s2019 = sand.u32 %s148, 1
          %s2020 = scalar_lea.sflag [#allocation8], %s2019
          %s2021 = sand.u32 %s148, 1
          %s2022 = smul.addr %s2021, 256
          %s2023 = scalar_lea.vmem [#allocation9], %s2022
          %2024 = dma.done %s2020, 4096
        $region64: #{tpu_custom_call.1} parent=59 // pred_fallthru
          _
      $region60: #{tpu_custom_call.1} parent=5 // pred_fallthru
        _
    $region6: #{tpu_custom_call.1} parent=1 // loop_footer
      %s32 = sadd.s32 1, %s28
    $region7: #{tpu_custom_call.1} parent=1 // loop_footer_branch
      %27 = sbr.rel target = $region3
    $region8: #{tpu_custom_call.1} parent=1 // loop_exit
      _
    %2025 = vsyncpa [#allocation7], 1
    %s2026 = scalar_lea.sflag [#allocation7], 1
    %2027 = vsyncpa %s2026, 1
    %2028 = vsyncpa [#allocation8], 1
    %s2029 = scalar_lea.sflag [#allocation8], 1
    %2030 = vsyncpa %s2029, 1

</llo_original>
